<compile_context>
chip_gen: v7x
topology: tpu7x:2x2x1
jax: 0.10.0
libtpu: 0.0.40
codegen_flags: <defaults>
</compile_context>

<pallas_src>
import functools

import jax
import jax.numpy as jnp
from jax.experimental import pallas as pl
from jax.experimental.pallas import tpu as pltpu


# ----------------------------------------------------------------------------
# Pallas kernel: embedding + LSTM recurrence + fc (time reduce) + fc2.
# ----------------------------------------------------------------------------
def lstm_model_kernel(
    x_ref,       # (D, T*N, A)        VMEM  f32   row index = t*N + n
    emb_w_ref,   # (D,)               SMEM  f32   embedding 1x1-conv weight
    emb_b_ref,   # (1,)               SMEM  f32   embedding bias
    w_ih0_ref,   # (H, 4H)            VMEM  bf16  layer-0 input->gates [i,f,o,g]
    w_hh0_ref,   # (H, 4H)            VMEM  bf16  layer-0 hidden->gates
    w_cat_ref,   # (max(L-1,1),2H,4H) VMEM  bf16  layers>=1 fused [W_ih; W_hh]
    b_ref,       # (L, 1, 4H)         VMEM  f32   b_ih+b_hh, [i,f,o,g], i/f/o *0.5
    fc_w_ref,    # (T,)               SMEM  f32   time-mixing weights
    fc_b_ref,    # (1,)               SMEM  f32
    fc2_w_ref,   # (H, Y)             VMEM  bf16
    fc2_b_ref,   # (1, Y)             VMEM  f32
    out_ref,     # (N, Y)             VMEM  f32
    *,
    N,
):
    D, TN, A = x_ref.shape
    T = TN // N
    L = b_ref.shape[0]
    H = A

    # ---- embedding (Conv2d(D,1,1x1)) hoisted out of the recurrence: ----------
    # one pass of D scalar*vector FMAs over the whole (T*N, A) slab.
    emb = emb_w_ref[0] * x_ref[0] + emb_b_ref[0]            # (T*N, A) f32
    for d in range(1, D):
        emb = emb + emb_w_ref[d] * x_ref[d]

    # ---- layer-0 input->gate projection hoisted: one (T*N,H)x(H,4H) GEMM -----
    # layer-0 bias folded in once here (covers all T timesteps).
    gates_x0 = (
        jnp.dot(emb.astype(jnp.bfloat16), w_ih0_ref[...],
                preferred_element_type=jnp.float32)
        + b_ref[0]
    )                                                        # (T*N, 4H) f32

    # ---- biases for layers >= 1: broadcast ONCE, outside the unrolled T loop -
    b_rest = [jnp.broadcast_to(b_ref[l], (N, 4 * H)) for l in range(1, L)]

    h = [jnp.zeros((N, H), jnp.float32) for _ in range(L)]
    c = [jnp.zeros((N, H), jnp.float32) for _ in range(L)]
    acc = jnp.zeros((N, H), jnp.float32)

    def apply_gates(gates, c_prev):
        # gates packed [i, f, o, g]; the i/f/o columns of W and b were
        # pre-scaled by 0.5 at repack time, so a SINGLE tanh over all 4H lanes
        # plus one VPU FMA yields sigmoid for i/f/o (sigmoid(z)=0.5*tanh(z/2)+0.5)
        # and plain tanh for g.  One EUP push per gate vector instead of 2-3.
        t_all = jnp.tanh(gates)                              # (N, 4H) f32
        ifo = 0.5 * t_all[:, 0:3 * H] + 0.5
        i_g = ifo[:, 0:H]
        f_g = ifo[:, H:2 * H]
        o_g = ifo[:, 2 * H:3 * H]
        g_g = t_all[:, 3 * H:4 * H]
        c_new = f_g * c_prev + i_g * g_g
        h_new = o_g * jnp.tanh(c_new)
        return h_new, c_new

    # ---- recurrence: fully unrolled over T (static, small) -------------------
    for t in range(T):
        # layer 0: x contribution + bias precomputed; only the recurrent half.
        gates0 = (
            gates_x0[t * N:(t + 1) * N, :]
            + jnp.dot(h[0].astype(jnp.bfloat16), w_hh0_ref[...],
                      preferred_element_type=jnp.float32)
        )
        h[0], c[0] = apply_gates(gates0, c[0])
        inp = h[0]

        # layers >= 1: ONE fused GEMM per step: [inp, h[l]] @ [W_ih; W_hh].
        for l in range(1, L):
            xh = jnp.concatenate([inp, h[l]], axis=-1).astype(jnp.bfloat16)
            gates = (
                jnp.dot(xh, w_cat_ref[l - 1],
                        preferred_element_type=jnp.float32)
                + b_rest[l - 1]
            )
            h[l], c[l] = apply_gates(gates, c[l])
            inp = h[l]

        # fc (Conv2d(T,1,1x1)) == weighted sum over time of top-layer output.
        acc = acc + fc_w_ref[t] * inp

    # ---- epilogue: fc2 (Conv2d(H, Y, 1x1)) ------------------------------------
    pred_time = acc + fc_b_ref[0]                            # (N, H) f32
    pred = (
        jnp.dot(pred_time.astype(jnp.bfloat16), fc2_w_ref[...],
                preferred_element_type=jnp.float32)
        + fc2_b_ref[...]
    )                                                        # (N, Y) f32
    out_ref[...] = pred.astype(out_ref.dtype)


# ----------------------------------------------------------------------------
# Parameter construction (deterministic, torch-shaped) and wrapper.
# ----------------------------------------------------------------------------
def init_params(key, X_assets, past_seq, Y_assets, dim_num, num_layers):
    H = X_assets
    keys = jax.random.split(key, 6 + 4 * num_layers)
    scale = 0.1

    def rnd(k, shape):
        return scale * jax.random.normal(k, shape, dtype=jnp.float32)

    p = {
        "emb_w": rnd(keys[0], (dim_num,)),          # Conv2d(D, 1, 1x1) weight
        "emb_b": rnd(keys[1], ()),                  # Conv2d(D, 1, 1x1) bias
        "fc_w": rnd(keys[2], (past_seq,)),          # Conv2d(T, 1, 1x1) weight
        "fc_b": rnd(keys[3], ()),                   # Conv2d(T, 1, 1x1) bias
        "fc2_w": rnd(keys[4], (Y_assets, H)),       # Conv2d(H, Y, 1x1) weight
        "fc2_b": rnd(keys[5], (Y_assets,)),         # Conv2d(H, Y, 1x1) bias
        "w_ih": [],
        "w_hh": [],
        "b_ih": [],
        "b_hh": [],
    }
    for l in range(num_layers):
        kk = keys[6 + 4 * l: 10 + 4 * l]
        p["w_ih"].append(rnd(kk[0], (4 * H, H)))    # input size == H for all layers
        p["w_hh"].append(rnd(kk[1], (4 * H, H)))
        p["b_ih"].append(rnd(kk[2], (4 * H,)))
        p["b_hh"].append(rnd(kk[3], (4 * H,)))
    return p


def _reorder_gates_last(w):
    """Reorder torch's [i, f, g, o] gate blocks (last axis, size 4H) to [i, f, o, g]."""
    H = w.shape[-1] // 4
    return jnp.concatenate(
        [w[..., 0:2 * H], w[..., 3 * H:4 * H], w[..., 2 * H:3 * H]], axis=-1)


def _prescale_ifo(w):
    """Scale the i/f/o columns (first 3H of the [i,f,o,g] packing) by 0.5.

    Enables the in-kernel sigmoid(z) = 0.5*tanh(z/2) + 0.5 rewrite (one tanh
    over the full 4H-lane gate vector instead of sigmoid(3H) + tanh(H)).
    """
    H = w.shape[-1] // 4
    scale = jnp.concatenate(
        [jnp.full((3 * H,), 0.5, jnp.float32), jnp.ones((H,), jnp.float32)])
    return w * scale


def pallas_forward(x, params):
    """x: (N, T, A, D) float32 -> (N, Y) float32."""
    N, T, A, D = x.shape
    H = A
    L = len(params["w_ih"])
    Y = params["fc2_w"].shape[0]

    # ---- layout / parameter repacking (wrapper-side glue, no model math) -----
    # x: (N, T, A, D) -> (D, T*N, A): D leads (cheap scalar-FMA reduce), the
    # (T, N) -> T*N flattening happens here so the kernel never reshapes.
    x_k = jnp.transpose(x, (3, 1, 0, 2)).reshape(D, T * N, A)

    emb_w_k = params["emb_w"].reshape(D)
    emb_b_k = params["emb_b"].reshape(1)

    # Per-layer gate weights: (H, 4H), gates [i, f, o, g] on the lane axis,
    # i/f/o columns pre-scaled by 0.5, cast to bf16 for the MXU.
    packed = []
    for l in range(L):
        wi = _prescale_ifo(_reorder_gates_last(params["w_ih"][l].T))   # (H, 4H)
        wh = _prescale_ifo(_reorder_gates_last(params["w_hh"][l].T))   # (H, 4H)
        packed.append((wi, wh))

    w_ih0_k = packed[0][0].astype(jnp.bfloat16)                        # (H, 4H)
    w_hh0_k = packed[0][1].astype(jnp.bfloat16)                        # (H, 4H)
    if L > 1:
        # Fused [W_ih; W_hh] so layers >= 1 need a single GEMM per step.
        w_cat_k = jnp.stack([
            jnp.concatenate([packed[l][0], packed[l][1]], axis=0)      # (2H, 4H)
            for l in range(1, L)
        ]).astype(jnp.bfloat16)                                        # (L-1, 2H, 4H)
    else:
        w_cat_k = jnp.zeros((1, 2 * H, 4 * H), jnp.bfloat16)           # unused dummy

    b_k = jnp.stack([
        _prescale_ifo(
            _reorder_gates_last(params["b_ih"][l] + params["b_hh"][l])
        ).reshape(1, 4 * H)
        for l in range(L)
    ])                                                                 # (L, 1, 4H) f32

    fc_w_k = params["fc_w"].reshape(T)
    fc_b_k = params["fc_b"].reshape(1)
    fc2_w_k = params["fc2_w"].T.astype(jnp.bfloat16)                   # (H, Y) bf16
    fc2_b_k = params["fc2_b"].reshape(1, Y)                            # (1, Y) f32

    vmem = pl.BlockSpec(memory_space=pltpu.MemorySpace.VMEM)
    smem = pl.BlockSpec(memory_space=pltpu.MemorySpace.SMEM)

    out = pl.pallas_call(
        functools.partial(lstm_model_kernel, N=N),
        out_shape=jax.ShapeDtypeStruct((N, Y), jnp.float32),
        in_specs=[
            vmem,   # x          (D, T*N, A)
            smem,   # emb_w      (D,)
            smem,   # emb_b      (1,)
            vmem,   # w_ih0      (H, 4H)       bf16
            vmem,   # w_hh0      (H, 4H)       bf16
            vmem,   # w_cat      (L-1, 2H, 4H) bf16
            vmem,   # bias       (L, 1, 4H)
            smem,   # fc_w       (T,)
            smem,   # fc_b       (1,)
            vmem,   # fc2_w      (H, Y)        bf16
            vmem,   # fc2_b      (1, Y)
        ],
        out_specs=vmem,
    )(x_k, emb_w_k, emb_b_k, w_ih0_k, w_hh0_k, w_cat_k, b_k,
      fc_w_k, fc_b_k, fc2_w_k, fc2_b_k)
    return out


# ----------------------------------------------------------------------------
# Pure-JAX reference (same math, torch-shaped params, full f32) for validation.
# ----------------------------------------------------------------------------
def reference_forward(x, p):
    N, T, A, D = x.shape
    H = A
    L = len(p["w_ih"])
    emb = jnp.einsum("ntad,d->nta", x, p["emb_w"]) + p["emb_b"]      # (N, T, A)

    h = [jnp.zeros((N, H), jnp.float32) for _ in range(L)]
    c = [jnp.zeros((N, H), jnp.float32) for _ in range(L)]
    outs = []
    for t in range(T):
        inp = emb[:, t, :]
        for l in range(L):
            gates = (inp @ p["w_ih"][l].T + h[l] @ p["w_hh"][l].T
                     + p["b_ih"][l] + p["b_hh"][l])
            i_g = jax.nn.sigmoid(gates[:, 0:H])
            f_g = jax.nn.sigmoid(gates[:, H:2 * H])
            g_g = jnp.tanh(gates[:, 2 * H:3 * H])
            o_g = jax.nn.sigmoid(gates[:, 3 * H:4 * H])
            c[l] = f_g * c[l] + i_g * g_g
            h[l] = o_g * jnp.tanh(c[l])
            inp = h[l]
        outs.append(inp)
    out = jnp.stack(outs, axis=1)                                    # (N, T, H)
    pred_time = jnp.einsum("nth,t->nh", out, p["fc_w"]) + p["fc_b"]  # (N, H)
    pred = pred_time @ p["fc2_w"].T + p["fc2_b"]                     # (N, Y)
    return pred


if __name__ == "__main__":
    # Small shapes consistent with the module:
    #   batch=2, past_seq=8, X_assets_num=16 (== lstm hidden), dim_num=4,
    #   Y_asset_num=4, num_layers=2.
    N, T, A, D, Y, L = 2, 8, 16, 4, 4, 2

    key = jax.random.PRNGKey(0)
    kx, kp = jax.random.split(key)
    x = jax.random.normal(kx, (N, T, A, D), dtype=jnp.float32)
    params = init_params(kp, X_assets=A, past_seq=T, Y_assets=Y,
                         dim_num=D, num_layers=L)

    out = pallas_forward(x, params)
    out = jax.block_until_ready(out)

    ref = reference_forward(x, params)
    assert out.shape == (N, Y), out.shape
    assert jnp.all(jnp.isfinite(out))
    assert jnp.allclose(out, ref, atol=1e-2, rtol=1e-2), (
        f"max abs diff {jnp.max(jnp.abs(out - ref))}")

    print("KERNEL_OK")
</pallas_src>

<mosaic_0001>
module attributes {stable_mosaic.version = 11 : i64} {
  func.func @lstm_model_kernel(%arg0: memref<4x16x16xf32, #tpu.memory_space<vmem>>, %arg1: memref<4xf32, #tpu.memory_space<smem>>, %arg2: memref<1xf32, #tpu.memory_space<smem>>, %arg3: memref<16x64xbf16, #tpu.memory_space<vmem>>, %arg4: memref<16x64xbf16, #tpu.memory_space<vmem>>, %arg5: memref<1x32x64xbf16, #tpu.memory_space<vmem>>, %arg6: memref<2x1x64xf32, #tpu.memory_space<vmem>>, %arg7: memref<8xf32, #tpu.memory_space<smem>>, %arg8: memref<1xf32, #tpu.memory_space<smem>>, %arg9: memref<16x4xbf16, #tpu.memory_space<vmem>>, %arg10: memref<1x4xf32, #tpu.memory_space<vmem>>, %arg11: memref<2x4xf32, #tpu.memory_space<vmem>>) attributes {dimension_semantics = [], scalar_prefetch = 0 : i64, scratch_operands = 0 : i64, tpu.core_type = #tpu.core_type<tc>} {
    %c0 = arith.constant 0 : index
    %0 = memref.load %arg1[%c0] : memref<4xf32, #tpu.memory_space<smem>>
    %c0_0 = arith.constant 0 : index
    %c0_1 = arith.constant 0 : index
    %c0_2 = arith.constant 0 : index
    %1 = vector.load %arg0[%c0_0, %c0_1, %c0_2] : memref<4x16x16xf32, #tpu.memory_space<vmem>>, vector<1x16x16xf32>
    %2 = vector.shape_cast %1 : vector<1x16x16xf32> to vector<16x16xf32>
    %3 = vector.broadcast %0 : f32 to vector<16x16xf32>
    %4 = arith.mulf %3, %2 : vector<16x16xf32>
    %c0_3 = arith.constant 0 : index
    %5 = memref.load %arg2[%c0_3] : memref<1xf32, #tpu.memory_space<smem>>
    %6 = vector.broadcast %5 : f32 to vector<16x16xf32>
    %7 = arith.addf %4, %6 : vector<16x16xf32>
    %c1 = arith.constant 1 : index
    %8 = memref.load %arg1[%c1] : memref<4xf32, #tpu.memory_space<smem>>
    %c1_4 = arith.constant 1 : index
    %c0_5 = arith.constant 0 : index
    %c0_6 = arith.constant 0 : index
    %9 = vector.load %arg0[%c1_4, %c0_5, %c0_6] : memref<4x16x16xf32, #tpu.memory_space<vmem>>, vector<1x16x16xf32>
    %10 = vector.shape_cast %9 : vector<1x16x16xf32> to vector<16x16xf32>
    %11 = vector.broadcast %8 : f32 to vector<16x16xf32>
    %12 = arith.mulf %11, %10 : vector<16x16xf32>
    %13 = arith.addf %7, %12 : vector<16x16xf32>
    %c2 = arith.constant 2 : index
    %14 = memref.load %arg1[%c2] : memref<4xf32, #tpu.memory_space<smem>>
    %c2_7 = arith.constant 2 : index
    %c0_8 = arith.constant 0 : index
    %c0_9 = arith.constant 0 : index
    %15 = vector.load %arg0[%c2_7, %c0_8, %c0_9] : memref<4x16x16xf32, #tpu.memory_space<vmem>>, vector<1x16x16xf32>
    %16 = vector.shape_cast %15 : vector<1x16x16xf32> to vector<16x16xf32>
    %17 = vector.broadcast %14 : f32 to vector<16x16xf32>
    %18 = arith.mulf %17, %16 : vector<16x16xf32>
    %19 = arith.addf %13, %18 : vector<16x16xf32>
    %c3 = arith.constant 3 : index
    %20 = memref.load %arg1[%c3] : memref<4xf32, #tpu.memory_space<smem>>
    %c3_10 = arith.constant 3 : index
    %c0_11 = arith.constant 0 : index
    %c0_12 = arith.constant 0 : index
    %21 = vector.load %arg0[%c3_10, %c0_11, %c0_12] : memref<4x16x16xf32, #tpu.memory_space<vmem>>, vector<1x16x16xf32>
    %22 = vector.shape_cast %21 : vector<1x16x16xf32> to vector<16x16xf32>
    %23 = vector.broadcast %20 : f32 to vector<16x16xf32>
    %24 = arith.mulf %23, %22 : vector<16x16xf32>
    %25 = arith.addf %19, %24 : vector<16x16xf32>
    %26 = arith.truncf %25 : vector<16x16xf32> to vector<16x16xbf16>
    %c0_13 = arith.constant 0 : index
    %c0_14 = arith.constant 0 : index
    %27 = vector.load %arg3[%c0_13, %c0_14] : memref<16x64xbf16, #tpu.memory_space<vmem>>, vector<16x64xbf16>
    %cst = arith.constant dense<0.000000e+00> : vector<16x64xf32>
    %28 = tpu.matmul %26, %27, %cst {dimension_numbers = #tpu.dot_dimension_numbers<[1], [0], [0], [1], [0, 0, 1, 1], [], []>} : vector<16x16xbf16>, vector<16x64xbf16>, vector<16x64xf32> -> vector<16x64xf32>
    %c0_15 = arith.constant 0 : index
    %c0_16 = arith.constant 0 : index
    %c0_17 = arith.constant 0 : index
    %29 = vector.load %arg6[%c0_15, %c0_16, %c0_17] : memref<2x1x64xf32, #tpu.memory_space<vmem>>, vector<1x1x64xf32>
    %30 = vector.shape_cast %29 : vector<1x1x64xf32> to vector<1x64xf32>
    %31 = vector.broadcast %30 : vector<1x64xf32> to vector<16x64xf32>
    %32 = arith.addf %28, %31 : vector<16x64xf32>
    %c1_18 = arith.constant 1 : index
    %c0_19 = arith.constant 0 : index
    %c0_20 = arith.constant 0 : index
    %33 = vector.load %arg6[%c1_18, %c0_19, %c0_20] : memref<2x1x64xf32, #tpu.memory_space<vmem>>, vector<1x1x64xf32>
    %34 = vector.shape_cast %33 : vector<1x1x64xf32> to vector<1x64xf32>
    %35 = vector.shape_cast %34 : vector<1x64xf32> to vector<1x64xf32>
    %36 = vector.broadcast %35 : vector<1x64xf32> to vector<2x64xf32>
    %cst_21 = arith.constant 0.000000e+00 : f32
    %37 = vector.broadcast %cst_21 : f32 to vector<2x16xf32>
    %cst_22 = arith.constant 0.000000e+00 : f32
    %38 = vector.broadcast %cst_22 : f32 to vector<2x16xf32>
    %cst_23 = arith.constant 0.000000e+00 : f32
    %39 = vector.broadcast %cst_23 : f32 to vector<2x16xf32>
    %cst_24 = arith.constant 0.000000e+00 : f32
    %40 = vector.broadcast %cst_24 : f32 to vector<2x16xf32>
    %cst_25 = arith.constant 0.000000e+00 : f32
    %41 = vector.broadcast %cst_25 : f32 to vector<2x16xf32>
    %42 = vector.extract_strided_slice %32 {offsets = [0, 0], sizes = [2, 64], strides = [1, 1]} : vector<16x64xf32> to vector<2x64xf32>
    %43 = arith.truncf %37 : vector<2x16xf32> to vector<2x16xbf16>
    %c0_26 = arith.constant 0 : index
    %c0_27 = arith.constant 0 : index
    %44 = vector.load %arg4[%c0_26, %c0_27] : memref<16x64xbf16, #tpu.memory_space<vmem>>, vector<16x64xbf16>
    %cst_28 = arith.constant dense<0.000000e+00> : vector<2x64xf32>
    %45 = tpu.matmul %43, %44, %cst_28 {dimension_numbers = #tpu.dot_dimension_numbers<[1], [0], [0], [1], [0, 0, 1, 1], [], []>} : vector<2x16xbf16>, vector<16x64xbf16>, vector<2x64xf32> -> vector<2x64xf32>
    %46 = arith.addf %42, %45 : vector<2x64xf32>
    %47 = math.tanh %46 : vector<2x64xf32>
    %48 = vector.extract_strided_slice %47 {offsets = [0, 0], sizes = [2, 48], strides = [1, 1]} : vector<2x64xf32> to vector<2x48xf32>
    %cst_29 = arith.constant 5.000000e-01 : f32
    %49 = vector.broadcast %cst_29 : f32 to vector<2x48xf32>
    %50 = arith.mulf %49, %48 : vector<2x48xf32>
    %cst_30 = arith.constant 5.000000e-01 : f32
    %51 = vector.broadcast %cst_30 : f32 to vector<2x48xf32>
    %52 = arith.addf %50, %51 : vector<2x48xf32>
    %53 = vector.extract_strided_slice %52 {offsets = [0, 0], sizes = [2, 16], strides = [1, 1]} : vector<2x48xf32> to vector<2x16xf32>
    %54 = vector.extract_strided_slice %52 {offsets = [0, 16], sizes = [2, 16], strides = [1, 1]} : vector<2x48xf32> to vector<2x16xf32>
    %55 = vector.extract_strided_slice %52 {offsets = [0, 32], sizes = [2, 16], strides = [1, 1]} : vector<2x48xf32> to vector<2x16xf32>
    %56 = vector.extract_strided_slice %47 {offsets = [0, 48], sizes = [2, 16], strides = [1, 1]} : vector<2x64xf32> to vector<2x16xf32>
    %57 = arith.mulf %54, %39 : vector<2x16xf32>
    %58 = arith.mulf %53, %56 : vector<2x16xf32>
    %59 = arith.addf %57, %58 : vector<2x16xf32>
    %60 = math.tanh %59 : vector<2x16xf32>
    %61 = arith.mulf %55, %60 : vector<2x16xf32>
    %62 = tpu.concatenate %61, %38 in 1 : vector<2x16xf32>, vector<2x16xf32> -> vector<2x32xf32>
    %63 = arith.truncf %62 : vector<2x32xf32> to vector<2x32xbf16>
    %c0_31 = arith.constant 0 : index
    %c0_32 = arith.constant 0 : index
    %c0_33 = arith.constant 0 : index
    %64 = vector.load %arg5[%c0_31, %c0_32, %c0_33] : memref<1x32x64xbf16, #tpu.memory_space<vmem>>, vector<1x32x64xbf16>
    %65 = vector.shape_cast %64 : vector<1x32x64xbf16> to vector<32x64xbf16>
    %cst_34 = arith.constant dense<0.000000e+00> : vector<2x64xf32>
    %66 = tpu.matmul %63, %65, %cst_34 {dimension_numbers = #tpu.dot_dimension_numbers<[1], [0], [0], [1], [0, 0, 1, 1], [], []>} : vector<2x32xbf16>, vector<32x64xbf16>, vector<2x64xf32> -> vector<2x64xf32>
    %67 = arith.addf %66, %36 : vector<2x64xf32>
    %68 = math.tanh %67 : vector<2x64xf32>
    %69 = vector.extract_strided_slice %68 {offsets = [0, 0], sizes = [2, 48], strides = [1, 1]} : vector<2x64xf32> to vector<2x48xf32>
    %cst_35 = arith.constant 5.000000e-01 : f32
    %70 = vector.broadcast %cst_35 : f32 to vector<2x48xf32>
    %71 = arith.mulf %70, %69 : vector<2x48xf32>
    %cst_36 = arith.constant 5.000000e-01 : f32
    %72 = vector.broadcast %cst_36 : f32 to vector<2x48xf32>
    %73 = arith.addf %71, %72 : vector<2x48xf32>
    %74 = vector.extract_strided_slice %73 {offsets = [0, 0], sizes = [2, 16], strides = [1, 1]} : vector<2x48xf32> to vector<2x16xf32>
    %75 = vector.extract_strided_slice %73 {offsets = [0, 16], sizes = [2, 16], strides = [1, 1]} : vector<2x48xf32> to vector<2x16xf32>
    %76 = vector.extract_strided_slice %73 {offsets = [0, 32], sizes = [2, 16], strides = [1, 1]} : vector<2x48xf32> to vector<2x16xf32>
    %77 = vector.extract_strided_slice %68 {offsets = [0, 48], sizes = [2, 16], strides = [1, 1]} : vector<2x64xf32> to vector<2x16xf32>
    %78 = arith.mulf %75, %40 : vector<2x16xf32>
    %79 = arith.mulf %74, %77 : vector<2x16xf32>
    %80 = arith.addf %78, %79 : vector<2x16xf32>
    %81 = math.tanh %80 : vector<2x16xf32>
    %82 = arith.mulf %76, %81 : vector<2x16xf32>
    %c0_37 = arith.constant 0 : index
    %83 = memref.load %arg7[%c0_37] : memref<8xf32, #tpu.memory_space<smem>>
    %84 = vector.broadcast %83 : f32 to vector<2x16xf32>
    %85 = arith.mulf %84, %82 : vector<2x16xf32>
    %86 = arith.addf %41, %85 : vector<2x16xf32>
    %87 = vector.extract_strided_slice %32 {offsets = [2, 0], sizes = [2, 64], strides = [1, 1]} : vector<16x64xf32> to vector<2x64xf32>
    %88 = arith.truncf %61 : vector<2x16xf32> to vector<2x16xbf16>
    %c0_38 = arith.constant 0 : index
    %c0_39 = arith.constant 0 : index
    %89 = vector.load %arg4[%c0_38, %c0_39] : memref<16x64xbf16, #tpu.memory_space<vmem>>, vector<16x64xbf16>
    %cst_40 = arith.constant dense<0.000000e+00> : vector<2x64xf32>
    %90 = tpu.matmul %88, %89, %cst_40 {dimension_numbers = #tpu.dot_dimension_numbers<[1], [0], [0], [1], [0, 0, 1, 1], [], []>} : vector<2x16xbf16>, vector<16x64xbf16>, vector<2x64xf32> -> vector<2x64xf32>
    %91 = arith.addf %87, %90 : vector<2x64xf32>
    %92 = math.tanh %91 : vector<2x64xf32>
    %93 = vector.extract_strided_slice %92 {offsets = [0, 0], sizes = [2, 48], strides = [1, 1]} : vector<2x64xf32> to vector<2x48xf32>
    %cst_41 = arith.constant 5.000000e-01 : f32
    %94 = vector.broadcast %cst_41 : f32 to vector<2x48xf32>
    %95 = arith.mulf %94, %93 : vector<2x48xf32>
    %cst_42 = arith.constant 5.000000e-01 : f32
    %96 = vector.broadcast %cst_42 : f32 to vector<2x48xf32>
    %97 = arith.addf %95, %96 : vector<2x48xf32>
    %98 = vector.extract_strided_slice %97 {offsets = [0, 0], sizes = [2, 16], strides = [1, 1]} : vector<2x48xf32> to vector<2x16xf32>
    %99 = vector.extract_strided_slice %97 {offsets = [0, 16], sizes = [2, 16], strides = [1, 1]} : vector<2x48xf32> to vector<2x16xf32>
    %100 = vector.extract_strided_slice %97 {offsets = [0, 32], sizes = [2, 16], strides = [1, 1]} : vector<2x48xf32> to vector<2x16xf32>
    %101 = vector.extract_strided_slice %92 {offsets = [0, 48], sizes = [2, 16], strides = [1, 1]} : vector<2x64xf32> to vector<2x16xf32>
    %102 = arith.mulf %99, %59 : vector<2x16xf32>
    %103 = arith.mulf %98, %101 : vector<2x16xf32>
    %104 = arith.addf %102, %103 : vector<2x16xf32>
    %105 = math.tanh %104 : vector<2x16xf32>
    %106 = arith.mulf %100, %105 : vector<2x16xf32>
    %107 = tpu.concatenate %106, %82 in 1 : vector<2x16xf32>, vector<2x16xf32> -> vector<2x32xf32>
    %108 = arith.truncf %107 : vector<2x32xf32> to vector<2x32xbf16>
    %c0_43 = arith.constant 0 : index
    %c0_44 = arith.constant 0 : index
    %c0_45 = arith.constant 0 : index
    %109 = vector.load %arg5[%c0_43, %c0_44, %c0_45] : memref<1x32x64xbf16, #tpu.memory_space<vmem>>, vector<1x32x64xbf16>
    %110 = vector.shape_cast %109 : vector<1x32x64xbf16> to vector<32x64xbf16>
    %cst_46 = arith.constant dense<0.000000e+00> : vector<2x64xf32>
    %111 = tpu.matmul %108, %110, %cst_46 {dimension_numbers = #tpu.dot_dimension_numbers<[1], [0], [0], [1], [0, 0, 1, 1], [], []>} : vector<2x32xbf16>, vector<32x64xbf16>, vector<2x64xf32> -> vector<2x64xf32>
    %112 = arith.addf %111, %36 : vector<2x64xf32>
    %113 = math.tanh %112 : vector<2x64xf32>
    %114 = vector.extract_strided_slice %113 {offsets = [0, 0], sizes = [2, 48], strides = [1, 1]} : vector<2x64xf32> to vector<2x48xf32>
    %cst_47 = arith.constant 5.000000e-01 : f32
    %115 = vector.broadcast %cst_47 : f32 to vector<2x48xf32>
    %116 = arith.mulf %115, %114 : vector<2x48xf32>
    %cst_48 = arith.constant 5.000000e-01 : f32
    %117 = vector.broadcast %cst_48 : f32 to vector<2x48xf32>
    %118 = arith.addf %116, %117 : vector<2x48xf32>
    %119 = vector.extract_strided_slice %118 {offsets = [0, 0], sizes = [2, 16], strides = [1, 1]} : vector<2x48xf32> to vector<2x16xf32>
    %120 = vector.extract_strided_slice %118 {offsets = [0, 16], sizes = [2, 16], strides = [1, 1]} : vector<2x48xf32> to vector<2x16xf32>
    %121 = vector.extract_strided_slice %118 {offsets = [0, 32], sizes = [2, 16], strides = [1, 1]} : vector<2x48xf32> to vector<2x16xf32>
    %122 = vector.extract_strided_slice %113 {offsets = [0, 48], sizes = [2, 16], strides = [1, 1]} : vector<2x64xf32> to vector<2x16xf32>
    %123 = arith.mulf %120, %80 : vector<2x16xf32>
    %124 = arith.mulf %119, %122 : vector<2x16xf32>
    %125 = arith.addf %123, %124 : vector<2x16xf32>
    %126 = math.tanh %125 : vector<2x16xf32>
    %127 = arith.mulf %121, %126 : vector<2x16xf32>
    %c1_49 = arith.constant 1 : index
    %128 = memref.load %arg7[%c1_49] : memref<8xf32, #tpu.memory_space<smem>>
    %129 = vector.broadcast %128 : f32 to vector<2x16xf32>
    %130 = arith.mulf %129, %127 : vector<2x16xf32>
    %131 = arith.addf %86, %130 : vector<2x16xf32>
    %132 = vector.extract_strided_slice %32 {offsets = [4, 0], sizes = [2, 64], strides = [1, 1]} : vector<16x64xf32> to vector<2x64xf32>
    %133 = arith.truncf %106 : vector<2x16xf32> to vector<2x16xbf16>
    %c0_50 = arith.constant 0 : index
    %c0_51 = arith.constant 0 : index
    %134 = vector.load %arg4[%c0_50, %c0_51] : memref<16x64xbf16, #tpu.memory_space<vmem>>, vector<16x64xbf16>
    %cst_52 = arith.constant dense<0.000000e+00> : vector<2x64xf32>
    %135 = tpu.matmul %133, %134, %cst_52 {dimension_numbers = #tpu.dot_dimension_numbers<[1], [0], [0], [1], [0, 0, 1, 1], [], []>} : vector<2x16xbf16>, vector<16x64xbf16>, vector<2x64xf32> -> vector<2x64xf32>
    %136 = arith.addf %132, %135 : vector<2x64xf32>
    %137 = math.tanh %136 : vector<2x64xf32>
    %138 = vector.extract_strided_slice %137 {offsets = [0, 0], sizes = [2, 48], strides = [1, 1]} : vector<2x64xf32> to vector<2x48xf32>
    %cst_53 = arith.constant 5.000000e-01 : f32
    %139 = vector.broadcast %cst_53 : f32 to vector<2x48xf32>
    %140 = arith.mulf %139, %138 : vector<2x48xf32>
    %cst_54 = arith.constant 5.000000e-01 : f32
    %141 = vector.broadcast %cst_54 : f32 to vector<2x48xf32>
    %142 = arith.addf %140, %141 : vector<2x48xf32>
    %143 = vector.extract_strided_slice %142 {offsets = [0, 0], sizes = [2, 16], strides = [1, 1]} : vector<2x48xf32> to vector<2x16xf32>
    %144 = vector.extract_strided_slice %142 {offsets = [0, 16], sizes = [2, 16], strides = [1, 1]} : vector<2x48xf32> to vector<2x16xf32>
    %145 = vector.extract_strided_slice %142 {offsets = [0, 32], sizes = [2, 16], strides = [1, 1]} : vector<2x48xf32> to vector<2x16xf32>
    %146 = vector.extract_strided_slice %137 {offsets = [0, 48], sizes = [2, 16], strides = [1, 1]} : vector<2x64xf32> to vector<2x16xf32>
    %147 = arith.mulf %144, %104 : vector<2x16xf32>
    %148 = arith.mulf %143, %146 : vector<2x16xf32>
    %149 = arith.addf %147, %148 : vector<2x16xf32>
    %150 = math.tanh %149 : vector<2x16xf32>
    %151 = arith.mulf %145, %150 : vector<2x16xf32>
    %152 = tpu.concatenate %151, %127 in 1 : vector<2x16xf32>, vector<2x16xf32> -> vector<2x32xf32>
    %153 = arith.truncf %152 : vector<2x32xf32> to vector<2x32xbf16>
    %c0_55 = arith.constant 0 : index
    %c0_56 = arith.constant 0 : index
    %c0_57 = arith.constant 0 : index
    %154 = vector.load %arg5[%c0_55, %c0_56, %c0_57] : memref<1x32x64xbf16, #tpu.memory_space<vmem>>, vector<1x32x64xbf16>
    %155 = vector.shape_cast %154 : vector<1x32x64xbf16> to vector<32x64xbf16>
    %cst_58 = arith.constant dense<0.000000e+00> : vector<2x64xf32>
    %156 = tpu.matmul %153, %155, %cst_58 {dimension_numbers = #tpu.dot_dimension_numbers<[1], [0], [0], [1], [0, 0, 1, 1], [], []>} : vector<2x32xbf16>, vector<32x64xbf16>, vector<2x64xf32> -> vector<2x64xf32>
    %157 = arith.addf %156, %36 : vector<2x64xf32>
    %158 = math.tanh %157 : vector<2x64xf32>
    %159 = vector.extract_strided_slice %158 {offsets = [0, 0], sizes = [2, 48], strides = [1, 1]} : vector<2x64xf32> to vector<2x48xf32>
    %cst_59 = arith.constant 5.000000e-01 : f32
    %160 = vector.broadcast %cst_59 : f32 to vector<2x48xf32>
    %161 = arith.mulf %160, %159 : vector<2x48xf32>
    %cst_60 = arith.constant 5.000000e-01 : f32
    %162 = vector.broadcast %cst_60 : f32 to vector<2x48xf32>
    %163 = arith.addf %161, %162 : vector<2x48xf32>
    %164 = vector.extract_strided_slice %163 {offsets = [0, 0], sizes = [2, 16], strides = [1, 1]} : vector<2x48xf32> to vector<2x16xf32>
    %165 = vector.extract_strided_slice %163 {offsets = [0, 16], sizes = [2, 16], strides = [1, 1]} : vector<2x48xf32> to vector<2x16xf32>
    %166 = vector.extract_strided_slice %163 {offsets = [0, 32], sizes = [2, 16], strides = [1, 1]} : vector<2x48xf32> to vector<2x16xf32>
    %167 = vector.extract_strided_slice %158 {offsets = [0, 48], sizes = [2, 16], strides = [1, 1]} : vector<2x64xf32> to vector<2x16xf32>
    %168 = arith.mulf %165, %125 : vector<2x16xf32>
    %169 = arith.mulf %164, %167 : vector<2x16xf32>
    %170 = arith.addf %168, %169 : vector<2x16xf32>
    %171 = math.tanh %170 : vector<2x16xf32>
    %172 = arith.mulf %166, %171 : vector<2x16xf32>
    %c2_61 = arith.constant 2 : index
    %173 = memref.load %arg7[%c2_61] : memref<8xf32, #tpu.memory_space<smem>>
    %174 = vector.broadcast %173 : f32 to vector<2x16xf32>
    %175 = arith.mulf %174, %172 : vector<2x16xf32>
    %176 = arith.addf %131, %175 : vector<2x16xf32>
    %177 = vector.extract_strided_slice %32 {offsets = [6, 0], sizes = [2, 64], strides = [1, 1]} : vector<16x64xf32> to vector<2x64xf32>
    %178 = arith.truncf %151 : vector<2x16xf32> to vector<2x16xbf16>
    %c0_62 = arith.constant 0 : index
    %c0_63 = arith.constant 0 : index
    %179 = vector.load %arg4[%c0_62, %c0_63] : memref<16x64xbf16, #tpu.memory_space<vmem>>, vector<16x64xbf16>
    %cst_64 = arith.constant dense<0.000000e+00> : vector<2x64xf32>
    %180 = tpu.matmul %178, %179, %cst_64 {dimension_numbers = #tpu.dot_dimension_numbers<[1], [0], [0], [1], [0, 0, 1, 1], [], []>} : vector<2x16xbf16>, vector<16x64xbf16>, vector<2x64xf32> -> vector<2x64xf32>
    %181 = arith.addf %177, %180 : vector<2x64xf32>
    %182 = math.tanh %181 : vector<2x64xf32>
    %183 = vector.extract_strided_slice %182 {offsets = [0, 0], sizes = [2, 48], strides = [1, 1]} : vector<2x64xf32> to vector<2x48xf32>
    %cst_65 = arith.constant 5.000000e-01 : f32
    %184 = vector.broadcast %cst_65 : f32 to vector<2x48xf32>
    %185 = arith.mulf %184, %183 : vector<2x48xf32>
    %cst_66 = arith.constant 5.000000e-01 : f32
    %186 = vector.broadcast %cst_66 : f32 to vector<2x48xf32>
    %187 = arith.addf %185, %186 : vector<2x48xf32>
    %188 = vector.extract_strided_slice %187 {offsets = [0, 0], sizes = [2, 16], strides = [1, 1]} : vector<2x48xf32> to vector<2x16xf32>
    %189 = vector.extract_strided_slice %187 {offsets = [0, 16], sizes = [2, 16], strides = [1, 1]} : vector<2x48xf32> to vector<2x16xf32>
    %190 = vector.extract_strided_slice %187 {offsets = [0, 32], sizes = [2, 16], strides = [1, 1]} : vector<2x48xf32> to vector<2x16xf32>
    %191 = vector.extract_strided_slice %182 {offsets = [0, 48], sizes = [2, 16], strides = [1, 1]} : vector<2x64xf32> to vector<2x16xf32>
    %192 = arith.mulf %189, %149 : vector<2x16xf32>
    %193 = arith.mulf %188, %191 : vector<2x16xf32>
    %194 = arith.addf %192, %193 : vector<2x16xf32>
    %195 = math.tanh %194 : vector<2x16xf32>
    %196 = arith.mulf %190, %195 : vector<2x16xf32>
    %197 = tpu.concatenate %196, %172 in 1 : vector<2x16xf32>, vector<2x16xf32> -> vector<2x32xf32>
    %198 = arith.truncf %197 : vector<2x32xf32> to vector<2x32xbf16>
    %c0_67 = arith.constant 0 : index
    %c0_68 = arith.constant 0 : index
    %c0_69 = arith.constant 0 : index
    %199 = vector.load %arg5[%c0_67, %c0_68, %c0_69] : memref<1x32x64xbf16, #tpu.memory_space<vmem>>, vector<1x32x64xbf16>
    %200 = vector.shape_cast %199 : vector<1x32x64xbf16> to vector<32x64xbf16>
    %cst_70 = arith.constant dense<0.000000e+00> : vector<2x64xf32>
    %201 = tpu.matmul %198, %200, %cst_70 {dimension_numbers = #tpu.dot_dimension_numbers<[1], [0], [0], [1], [0, 0, 1, 1], [], []>} : vector<2x32xbf16>, vector<32x64xbf16>, vector<2x64xf32> -> vector<2x64xf32>
    %202 = arith.addf %201, %36 : vector<2x64xf32>
    %203 = math.tanh %202 : vector<2x64xf32>
    %204 = vector.extract_strided_slice %203 {offsets = [0, 0], sizes = [2, 48], strides = [1, 1]} : vector<2x64xf32> to vector<2x48xf32>
    %cst_71 = arith.constant 5.000000e-01 : f32
    %205 = vector.broadcast %cst_71 : f32 to vector<2x48xf32>
    %206 = arith.mulf %205, %204 : vector<2x48xf32>
    %cst_72 = arith.constant 5.000000e-01 : f32
    %207 = vector.broadcast %cst_72 : f32 to vector<2x48xf32>
    %208 = arith.addf %206, %207 : vector<2x48xf32>
    %209 = vector.extract_strided_slice %208 {offsets = [0, 0], sizes = [2, 16], strides = [1, 1]} : vector<2x48xf32> to vector<2x16xf32>
    %210 = vector.extract_strided_slice %208 {offsets = [0, 16], sizes = [2, 16], strides = [1, 1]} : vector<2x48xf32> to vector<2x16xf32>
    %211 = vector.extract_strided_slice %208 {offsets = [0, 32], sizes = [2, 16], strides = [1, 1]} : vector<2x48xf32> to vector<2x16xf32>
    %212 = vector.extract_strided_slice %203 {offsets = [0, 48], sizes = [2, 16], strides = [1, 1]} : vector<2x64xf32> to vector<2x16xf32>
    %213 = arith.mulf %210, %170 : vector<2x16xf32>
    %214 = arith.mulf %209, %212 : vector<2x16xf32>
    %215 = arith.addf %213, %214 : vector<2x16xf32>
    %216 = math.tanh %215 : vector<2x16xf32>
    %217 = arith.mulf %211, %216 : vector<2x16xf32>
    %c3_73 = arith.constant 3 : index
    %218 = memref.load %arg7[%c3_73] : memref<8xf32, #tpu.memory_space<smem>>
    %219 = vector.broadcast %218 : f32 to vector<2x16xf32>
    %220 = arith.mulf %219, %217 : vector<2x16xf32>
    %221 = arith.addf %176, %220 : vector<2x16xf32>
    %222 = vector.extract_strided_slice %32 {offsets = [8, 0], sizes = [2, 64], strides = [1, 1]} : vector<16x64xf32> to vector<2x64xf32>
    %223 = arith.truncf %196 : vector<2x16xf32> to vector<2x16xbf16>
    %c0_74 = arith.constant 0 : index
    %c0_75 = arith.constant 0 : index
    %224 = vector.load %arg4[%c0_74, %c0_75] : memref<16x64xbf16, #tpu.memory_space<vmem>>, vector<16x64xbf16>
    %cst_76 = arith.constant dense<0.000000e+00> : vector<2x64xf32>
    %225 = tpu.matmul %223, %224, %cst_76 {dimension_numbers = #tpu.dot_dimension_numbers<[1], [0], [0], [1], [0, 0, 1, 1], [], []>} : vector<2x16xbf16>, vector<16x64xbf16>, vector<2x64xf32> -> vector<2x64xf32>
    %226 = arith.addf %222, %225 : vector<2x64xf32>
    %227 = math.tanh %226 : vector<2x64xf32>
    %228 = vector.extract_strided_slice %227 {offsets = [0, 0], sizes = [2, 48], strides = [1, 1]} : vector<2x64xf32> to vector<2x48xf32>
    %cst_77 = arith.constant 5.000000e-01 : f32
    %229 = vector.broadcast %cst_77 : f32 to vector<2x48xf32>
    %230 = arith.mulf %229, %228 : vector<2x48xf32>
    %cst_78 = arith.constant 5.000000e-01 : f32
    %231 = vector.broadcast %cst_78 : f32 to vector<2x48xf32>
    %232 = arith.addf %230, %231 : vector<2x48xf32>
    %233 = vector.extract_strided_slice %232 {offsets = [0, 0], sizes = [2, 16], strides = [1, 1]} : vector<2x48xf32> to vector<2x16xf32>
    %234 = vector.extract_strided_slice %232 {offsets = [0, 16], sizes = [2, 16], strides = [1, 1]} : vector<2x48xf32> to vector<2x16xf32>
    %235 = vector.extract_strided_slice %232 {offsets = [0, 32], sizes = [2, 16], strides = [1, 1]} : vector<2x48xf32> to vector<2x16xf32>
    %236 = vector.extract_strided_slice %227 {offsets = [0, 48], sizes = [2, 16], strides = [1, 1]} : vector<2x64xf32> to vector<2x16xf32>
    %237 = arith.mulf %234, %194 : vector<2x16xf32>
    %238 = arith.mulf %233, %236 : vector<2x16xf32>
    %239 = arith.addf %237, %238 : vector<2x16xf32>
    %240 = math.tanh %239 : vector<2x16xf32>
    %241 = arith.mulf %235, %240 : vector<2x16xf32>
    %242 = tpu.concatenate %241, %217 in 1 : vector<2x16xf32>, vector<2x16xf32> -> vector<2x32xf32>
    %243 = arith.truncf %242 : vector<2x32xf32> to vector<2x32xbf16>
    %c0_79 = arith.constant 0 : index
    %c0_80 = arith.constant 0 : index
    %c0_81 = arith.constant 0 : index
    %244 = vector.load %arg5[%c0_79, %c0_80, %c0_81] : memref<1x32x64xbf16, #tpu.memory_space<vmem>>, vector<1x32x64xbf16>
    %245 = vector.shape_cast %244 : vector<1x32x64xbf16> to vector<32x64xbf16>
    %cst_82 = arith.constant dense<0.000000e+00> : vector<2x64xf32>
    %246 = tpu.matmul %243, %245, %cst_82 {dimension_numbers = #tpu.dot_dimension_numbers<[1], [0], [0], [1], [0, 0, 1, 1], [], []>} : vector<2x32xbf16>, vector<32x64xbf16>, vector<2x64xf32> -> vector<2x64xf32>
    %247 = arith.addf %246, %36 : vector<2x64xf32>
    %248 = math.tanh %247 : vector<2x64xf32>
    %249 = vector.extract_strided_slice %248 {offsets = [0, 0], sizes = [2, 48], strides = [1, 1]} : vector<2x64xf32> to vector<2x48xf32>
    %cst_83 = arith.constant 5.000000e-01 : f32
    %250 = vector.broadcast %cst_83 : f32 to vector<2x48xf32>
    %251 = arith.mulf %250, %249 : vector<2x48xf32>
    %cst_84 = arith.constant 5.000000e-01 : f32
    %252 = vector.broadcast %cst_84 : f32 to vector<2x48xf32>
    %253 = arith.addf %251, %252 : vector<2x48xf32>
    %254 = vector.extract_strided_slice %253 {offsets = [0, 0], sizes = [2, 16], strides = [1, 1]} : vector<2x48xf32> to vector<2x16xf32>
    %255 = vector.extract_strided_slice %253 {offsets = [0, 16], sizes = [2, 16], strides = [1, 1]} : vector<2x48xf32> to vector<2x16xf32>
    %256 = vector.extract_strided_slice %253 {offsets = [0, 32], sizes = [2, 16], strides = [1, 1]} : vector<2x48xf32> to vector<2x16xf32>
    %257 = vector.extract_strided_slice %248 {offsets = [0, 48], sizes = [2, 16], strides = [1, 1]} : vector<2x64xf32> to vector<2x16xf32>
    %258 = arith.mulf %255, %215 : vector<2x16xf32>
    %259 = arith.mulf %254, %257 : vector<2x16xf32>
    %260 = arith.addf %258, %259 : vector<2x16xf32>
    %261 = math.tanh %260 : vector<2x16xf32>
    %262 = arith.mulf %256, %261 : vector<2x16xf32>
    %c4 = arith.constant 4 : index
    %263 = memref.load %arg7[%c4] : memref<8xf32, #tpu.memory_space<smem>>
    %264 = vector.broadcast %263 : f32 to vector<2x16xf32>
    %265 = arith.mulf %264, %262 : vector<2x16xf32>
    %266 = arith.addf %221, %265 : vector<2x16xf32>
    %267 = vector.extract_strided_slice %32 {offsets = [10, 0], sizes = [2, 64], strides = [1, 1]} : vector<16x64xf32> to vector<2x64xf32>
    %268 = arith.truncf %241 : vector<2x16xf32> to vector<2x16xbf16>
    %c0_85 = arith.constant 0 : index
    %c0_86 = arith.constant 0 : index
    %269 = vector.load %arg4[%c0_85, %c0_86] : memref<16x64xbf16, #tpu.memory_space<vmem>>, vector<16x64xbf16>
    %cst_87 = arith.constant dense<0.000000e+00> : vector<2x64xf32>
    %270 = tpu.matmul %268, %269, %cst_87 {dimension_numbers = #tpu.dot_dimension_numbers<[1], [0], [0], [1], [0, 0, 1, 1], [], []>} : vector<2x16xbf16>, vector<16x64xbf16>, vector<2x64xf32> -> vector<2x64xf32>
    %271 = arith.addf %267, %270 : vector<2x64xf32>
    %272 = math.tanh %271 : vector<2x64xf32>
    %273 = vector.extract_strided_slice %272 {offsets = [0, 0], sizes = [2, 48], strides = [1, 1]} : vector<2x64xf32> to vector<2x48xf32>
    %cst_88 = arith.constant 5.000000e-01 : f32
    %274 = vector.broadcast %cst_88 : f32 to vector<2x48xf32>
    %275 = arith.mulf %274, %273 : vector<2x48xf32>
    %cst_89 = arith.constant 5.000000e-01 : f32
    %276 = vector.broadcast %cst_89 : f32 to vector<2x48xf32>
    %277 = arith.addf %275, %276 : vector<2x48xf32>
    %278 = vector.extract_strided_slice %277 {offsets = [0, 0], sizes = [2, 16], strides = [1, 1]} : vector<2x48xf32> to vector<2x16xf32>
    %279 = vector.extract_strided_slice %277 {offsets = [0, 16], sizes = [2, 16], strides = [1, 1]} : vector<2x48xf32> to vector<2x16xf32>
    %280 = vector.extract_strided_slice %277 {offsets = [0, 32], sizes = [2, 16], strides = [1, 1]} : vector<2x48xf32> to vector<2x16xf32>
    %281 = vector.extract_strided_slice %272 {offsets = [0, 48], sizes = [2, 16], strides = [1, 1]} : vector<2x64xf32> to vector<2x16xf32>
    %282 = arith.mulf %279, %239 : vector<2x16xf32>
    %283 = arith.mulf %278, %281 : vector<2x16xf32>
    %284 = arith.addf %282, %283 : vector<2x16xf32>
    %285 = math.tanh %284 : vector<2x16xf32>
    %286 = arith.mulf %280, %285 : vector<2x16xf32>
    %287 = tpu.concatenate %286, %262 in 1 : vector<2x16xf32>, vector<2x16xf32> -> vector<2x32xf32>
    %288 = arith.truncf %287 : vector<2x32xf32> to vector<2x32xbf16>
    %c0_90 = arith.constant 0 : index
    %c0_91 = arith.constant 0 : index
    %c0_92 = arith.constant 0 : index
    %289 = vector.load %arg5[%c0_90, %c0_91, %c0_92] : memref<1x32x64xbf16, #tpu.memory_space<vmem>>, vector<1x32x64xbf16>
    %290 = vector.shape_cast %289 : vector<1x32x64xbf16> to vector<32x64xbf16>
    %cst_93 = arith.constant dense<0.000000e+00> : vector<2x64xf32>
    %291 = tpu.matmul %288, %290, %cst_93 {dimension_numbers = #tpu.dot_dimension_numbers<[1], [0], [0], [1], [0, 0, 1, 1], [], []>} : vector<2x32xbf16>, vector<32x64xbf16>, vector<2x64xf32> -> vector<2x64xf32>
    %292 = arith.addf %291, %36 : vector<2x64xf32>
    %293 = math.tanh %292 : vector<2x64xf32>
    %294 = vector.extract_strided_slice %293 {offsets = [0, 0], sizes = [2, 48], strides = [1, 1]} : vector<2x64xf32> to vector<2x48xf32>
    %cst_94 = arith.constant 5.000000e-01 : f32
    %295 = vector.broadcast %cst_94 : f32 to vector<2x48xf32>
    %296 = arith.mulf %295, %294 : vector<2x48xf32>
    %cst_95 = arith.constant 5.000000e-01 : f32
    %297 = vector.broadcast %cst_95 : f32 to vector<2x48xf32>
    %298 = arith.addf %296, %297 : vector<2x48xf32>
    %299 = vector.extract_strided_slice %298 {offsets = [0, 0], sizes = [2, 16], strides = [1, 1]} : vector<2x48xf32> to vector<2x16xf32>
    %300 = vector.extract_strided_slice %298 {offsets = [0, 16], sizes = [2, 16], strides = [1, 1]} : vector<2x48xf32> to vector<2x16xf32>
    %301 = vector.extract_strided_slice %298 {offsets = [0, 32], sizes = [2, 16], strides = [1, 1]} : vector<2x48xf32> to vector<2x16xf32>
    %302 = vector.extract_strided_slice %293 {offsets = [0, 48], sizes = [2, 16], strides = [1, 1]} : vector<2x64xf32> to vector<2x16xf32>
    %303 = arith.mulf %300, %260 : vector<2x16xf32>
    %304 = arith.mulf %299, %302 : vector<2x16xf32>
    %305 = arith.addf %303, %304 : vector<2x16xf32>
    %306 = math.tanh %305 : vector<2x16xf32>
    %307 = arith.mulf %301, %306 : vector<2x16xf32>
    %c5 = arith.constant 5 : index
    %308 = memref.load %arg7[%c5] : memref<8xf32, #tpu.memory_space<smem>>
    %309 = vector.broadcast %308 : f32 to vector<2x16xf32>
    %310 = arith.mulf %309, %307 : vector<2x16xf32>
    %311 = arith.addf %266, %310 : vector<2x16xf32>
    %312 = vector.extract_strided_slice %32 {offsets = [12, 0], sizes = [2, 64], strides = [1, 1]} : vector<16x64xf32> to vector<2x64xf32>
    %313 = arith.truncf %286 : vector<2x16xf32> to vector<2x16xbf16>
    %c0_96 = arith.constant 0 : index
    %c0_97 = arith.constant 0 : index
    %314 = vector.load %arg4[%c0_96, %c0_97] : memref<16x64xbf16, #tpu.memory_space<vmem>>, vector<16x64xbf16>
    %cst_98 = arith.constant dense<0.000000e+00> : vector<2x64xf32>
    %315 = tpu.matmul %313, %314, %cst_98 {dimension_numbers = #tpu.dot_dimension_numbers<[1], [0], [0], [1], [0, 0, 1, 1], [], []>} : vector<2x16xbf16>, vector<16x64xbf16>, vector<2x64xf32> -> vector<2x64xf32>
    %316 = arith.addf %312, %315 : vector<2x64xf32>
    %317 = math.tanh %316 : vector<2x64xf32>
    %318 = vector.extract_strided_slice %317 {offsets = [0, 0], sizes = [2, 48], strides = [1, 1]} : vector<2x64xf32> to vector<2x48xf32>
    %cst_99 = arith.constant 5.000000e-01 : f32
    %319 = vector.broadcast %cst_99 : f32 to vector<2x48xf32>
    %320 = arith.mulf %319, %318 : vector<2x48xf32>
    %cst_100 = arith.constant 5.000000e-01 : f32
    %321 = vector.broadcast %cst_100 : f32 to vector<2x48xf32>
    %322 = arith.addf %320, %321 : vector<2x48xf32>
    %323 = vector.extract_strided_slice %322 {offsets = [0, 0], sizes = [2, 16], strides = [1, 1]} : vector<2x48xf32> to vector<2x16xf32>
    %324 = vector.extract_strided_slice %322 {offsets = [0, 16], sizes = [2, 16], strides = [1, 1]} : vector<2x48xf32> to vector<2x16xf32>
    %325 = vector.extract_strided_slice %322 {offsets = [0, 32], sizes = [2, 16], strides = [1, 1]} : vector<2x48xf32> to vector<2x16xf32>
    %326 = vector.extract_strided_slice %317 {offsets = [0, 48], sizes = [2, 16], strides = [1, 1]} : vector<2x64xf32> to vector<2x16xf32>
    %327 = arith.mulf %324, %284 : vector<2x16xf32>
    %328 = arith.mulf %323, %326 : vector<2x16xf32>
    %329 = arith.addf %327, %328 : vector<2x16xf32>
    %330 = math.tanh %329 : vector<2x16xf32>
    %331 = arith.mulf %325, %330 : vector<2x16xf32>
    %332 = tpu.concatenate %331, %307 in 1 : vector<2x16xf32>, vector<2x16xf32> -> vector<2x32xf32>
    %333 = arith.truncf %332 : vector<2x32xf32> to vector<2x32xbf16>
    %c0_101 = arith.constant 0 : index
    %c0_102 = arith.constant 0 : index
    %c0_103 = arith.constant 0 : index
    %334 = vector.load %arg5[%c0_101, %c0_102, %c0_103] : memref<1x32x64xbf16, #tpu.memory_space<vmem>>, vector<1x32x64xbf16>
    %335 = vector.shape_cast %334 : vector<1x32x64xbf16> to vector<32x64xbf16>
    %cst_104 = arith.constant dense<0.000000e+00> : vector<2x64xf32>
    %336 = tpu.matmul %333, %335, %cst_104 {dimension_numbers = #tpu.dot_dimension_numbers<[1], [0], [0], [1], [0, 0, 1, 1], [], []>} : vector<2x32xbf16>, vector<32x64xbf16>, vector<2x64xf32> -> vector<2x64xf32>
    %337 = arith.addf %336, %36 : vector<2x64xf32>
    %338 = math.tanh %337 : vector<2x64xf32>
    %339 = vector.extract_strided_slice %338 {offsets = [0, 0], sizes = [2, 48], strides = [1, 1]} : vector<2x64xf32> to vector<2x48xf32>
    %cst_105 = arith.constant 5.000000e-01 : f32
    %340 = vector.broadcast %cst_105 : f32 to vector<2x48xf32>
    %341 = arith.mulf %340, %339 : vector<2x48xf32>
    %cst_106 = arith.constant 5.000000e-01 : f32
    %342 = vector.broadcast %cst_106 : f32 to vector<2x48xf32>
    %343 = arith.addf %341, %342 : vector<2x48xf32>
    %344 = vector.extract_strided_slice %343 {offsets = [0, 0], sizes = [2, 16], strides = [1, 1]} : vector<2x48xf32> to vector<2x16xf32>
    %345 = vector.extract_strided_slice %343 {offsets = [0, 16], sizes = [2, 16], strides = [1, 1]} : vector<2x48xf32> to vector<2x16xf32>
    %346 = vector.extract_strided_slice %343 {offsets = [0, 32], sizes = [2, 16], strides = [1, 1]} : vector<2x48xf32> to vector<2x16xf32>
    %347 = vector.extract_strided_slice %338 {offsets = [0, 48], sizes = [2, 16], strides = [1, 1]} : vector<2x64xf32> to vector<2x16xf32>
    %348 = arith.mulf %345, %305 : vector<2x16xf32>
    %349 = arith.mulf %344, %347 : vector<2x16xf32>
    %350 = arith.addf %348, %349 : vector<2x16xf32>
    %351 = math.tanh %350 : vector<2x16xf32>
    %352 = arith.mulf %346, %351 : vector<2x16xf32>
    %c6 = arith.constant 6 : index
    %353 = memref.load %arg7[%c6] : memref<8xf32, #tpu.memory_space<smem>>
    %354 = vector.broadcast %353 : f32 to vector<2x16xf32>
    %355 = arith.mulf %354, %352 : vector<2x16xf32>
    %356 = arith.addf %311, %355 : vector<2x16xf32>
    %357 = vector.extract_strided_slice %32 {offsets = [14, 0], sizes = [2, 64], strides = [1, 1]} : vector<16x64xf32> to vector<2x64xf32>
    %358 = arith.truncf %331 : vector<2x16xf32> to vector<2x16xbf16>
    %c0_107 = arith.constant 0 : index
    %c0_108 = arith.constant 0 : index
    %359 = vector.load %arg4[%c0_107, %c0_108] : memref<16x64xbf16, #tpu.memory_space<vmem>>, vector<16x64xbf16>
    %cst_109 = arith.constant dense<0.000000e+00> : vector<2x64xf32>
    %360 = tpu.matmul %358, %359, %cst_109 {dimension_numbers = #tpu.dot_dimension_numbers<[1], [0], [0], [1], [0, 0, 1, 1], [], []>} : vector<2x16xbf16>, vector<16x64xbf16>, vector<2x64xf32> -> vector<2x64xf32>
    %361 = arith.addf %357, %360 : vector<2x64xf32>
    %362 = math.tanh %361 : vector<2x64xf32>
    %363 = vector.extract_strided_slice %362 {offsets = [0, 0], sizes = [2, 48], strides = [1, 1]} : vector<2x64xf32> to vector<2x48xf32>
    %cst_110 = arith.constant 5.000000e-01 : f32
    %364 = vector.broadcast %cst_110 : f32 to vector<2x48xf32>
    %365 = arith.mulf %364, %363 : vector<2x48xf32>
    %cst_111 = arith.constant 5.000000e-01 : f32
    %366 = vector.broadcast %cst_111 : f32 to vector<2x48xf32>
    %367 = arith.addf %365, %366 : vector<2x48xf32>
    %368 = vector.extract_strided_slice %367 {offsets = [0, 0], sizes = [2, 16], strides = [1, 1]} : vector<2x48xf32> to vector<2x16xf32>
    %369 = vector.extract_strided_slice %367 {offsets = [0, 16], sizes = [2, 16], strides = [1, 1]} : vector<2x48xf32> to vector<2x16xf32>
    %370 = vector.extract_strided_slice %367 {offsets = [0, 32], sizes = [2, 16], strides = [1, 1]} : vector<2x48xf32> to vector<2x16xf32>
    %371 = vector.extract_strided_slice %362 {offsets = [0, 48], sizes = [2, 16], strides = [1, 1]} : vector<2x64xf32> to vector<2x16xf32>
    %372 = arith.mulf %369, %329 : vector<2x16xf32>
    %373 = arith.mulf %368, %371 : vector<2x16xf32>
    %374 = arith.addf %372, %373 : vector<2x16xf32>
    %375 = math.tanh %374 : vector<2x16xf32>
    %376 = arith.mulf %370, %375 : vector<2x16xf32>
    %377 = tpu.concatenate %376, %352 in 1 : vector<2x16xf32>, vector<2x16xf32> -> vector<2x32xf32>
    %378 = arith.truncf %377 : vector<2x32xf32> to vector<2x32xbf16>
    %c0_112 = arith.constant 0 : index
    %c0_113 = arith.constant 0 : index
    %c0_114 = arith.constant 0 : index
    %379 = vector.load %arg5[%c0_112, %c0_113, %c0_114] : memref<1x32x64xbf16, #tpu.memory_space<vmem>>, vector<1x32x64xbf16>
    %380 = vector.shape_cast %379 : vector<1x32x64xbf16> to vector<32x64xbf16>
    %cst_115 = arith.constant dense<0.000000e+00> : vector<2x64xf32>
    %381 = tpu.matmul %378, %380, %cst_115 {dimension_numbers = #tpu.dot_dimension_numbers<[1], [0], [0], [1], [0, 0, 1, 1], [], []>} : vector<2x32xbf16>, vector<32x64xbf16>, vector<2x64xf32> -> vector<2x64xf32>
    %382 = arith.addf %381, %36 : vector<2x64xf32>
    %383 = math.tanh %382 : vector<2x64xf32>
    %384 = vector.extract_strided_slice %383 {offsets = [0, 0], sizes = [2, 48], strides = [1, 1]} : vector<2x64xf32> to vector<2x48xf32>
    %cst_116 = arith.constant 5.000000e-01 : f32
    %385 = vector.broadcast %cst_116 : f32 to vector<2x48xf32>
    %386 = arith.mulf %385, %384 : vector<2x48xf32>
    %cst_117 = arith.constant 5.000000e-01 : f32
    %387 = vector.broadcast %cst_117 : f32 to vector<2x48xf32>
    %388 = arith.addf %386, %387 : vector<2x48xf32>
    %389 = vector.extract_strided_slice %388 {offsets = [0, 0], sizes = [2, 16], strides = [1, 1]} : vector<2x48xf32> to vector<2x16xf32>
    %390 = vector.extract_strided_slice %388 {offsets = [0, 16], sizes = [2, 16], strides = [1, 1]} : vector<2x48xf32> to vector<2x16xf32>
    %391 = vector.extract_strided_slice %388 {offsets = [0, 32], sizes = [2, 16], strides = [1, 1]} : vector<2x48xf32> to vector<2x16xf32>
    %392 = vector.extract_strided_slice %383 {offsets = [0, 48], sizes = [2, 16], strides = [1, 1]} : vector<2x64xf32> to vector<2x16xf32>
    %393 = arith.mulf %390, %350 : vector<2x16xf32>
    %394 = arith.mulf %389, %392 : vector<2x16xf32>
    %395 = arith.addf %393, %394 : vector<2x16xf32>
    %396 = math.tanh %395 : vector<2x16xf32>
    %397 = arith.mulf %391, %396 : vector<2x16xf32>
    %c7 = arith.constant 7 : index
    %398 = memref.load %arg7[%c7] : memref<8xf32, #tpu.memory_space<smem>>
    %399 = vector.broadcast %398 : f32 to vector<2x16xf32>
    %400 = arith.mulf %399, %397 : vector<2x16xf32>
    %401 = arith.addf %356, %400 : vector<2x16xf32>
    %c0_118 = arith.constant 0 : index
    %402 = memref.load %arg8[%c0_118] : memref<1xf32, #tpu.memory_space<smem>>
    %403 = vector.broadcast %402 : f32 to vector<2x16xf32>
    %404 = arith.addf %401, %403 : vector<2x16xf32>
    %405 = arith.truncf %404 : vector<2x16xf32> to vector<2x16xbf16>
    %c0_119 = arith.constant 0 : index
    %c0_120 = arith.constant 0 : index
    %406 = vector.load %arg9[%c0_119, %c0_120] : memref<16x4xbf16, #tpu.memory_space<vmem>>, vector<16x4xbf16>
    %cst_121 = arith.constant dense<0.000000e+00> : vector<2x4xf32>
    %407 = tpu.matmul %405, %406, %cst_121 {dimension_numbers = #tpu.dot_dimension_numbers<[1], [0], [0], [1], [0, 0, 1, 1], [], []>} : vector<2x16xbf16>, vector<16x4xbf16>, vector<2x4xf32> -> vector<2x4xf32>
    %c0_122 = arith.constant 0 : index
    %c0_123 = arith.constant 0 : index
    %408 = vector.load %arg10[%c0_122, %c0_123] : memref<1x4xf32, #tpu.memory_space<vmem>>, vector<1x4xf32>
    %409 = vector.broadcast %408 : vector<1x4xf32> to vector<2x4xf32>
    %410 = arith.addf %407, %409 : vector<2x4xf32>
    %c0_124 = arith.constant 0 : index
    %c0_125 = arith.constant 0 : index
    %411 = vector.load %arg11[%c0_124, %c0_125] : memref<2x4xf32, #tpu.memory_space<vmem>>, vector<2x4xf32>
    tpu.vector_store %arg11[%c0_124, %c0_125], %410 {strides = array<i32>} : memref<2x4xf32, #tpu.memory_space<vmem>>, vector<2x4xf32>,
    return
  }
}

</mosaic_0001>

<llo_original>
// kernel: tpu_custom_call.1
$region0: #{tpu_custom_call.1}
  #allocation0 [shape = 'u32[]', space=smem, size = 0x4, offset = 0x4, fixed_abs, tag = 'smem constant byte address 0x4 - core index']
  #allocation1 [shape = 'u32[144,128]{1,0:T(1,128)}', space=vmem, size = 0x12000, scoped, tag = 'internal scratch']
  #allocation2 [shape = 'f32[1]{0:T(128)S(6)}', space=smem, size = 0x200, scoped, tag = 'scoped memory for tpu_custom_call.1']
  #allocation3 [shape = 'f32[1]{0:T(128)S(6)}', space=smem, size = 0x200, scoped, tag = 'scoped memory for tpu_custom_call.1']
  %s0 = inlined_call_operand.hbm [shape: f32[4,16,16], index: 0, kind: input, shape index: {}]
  %s1 = inlined_call_operand.hbm [shape: f32[4], index: 1, kind: input, shape index: {}]
  %s2 = inlined_call_operand.<no memory space> [shape: f32[1], index: 2, kind: input, shape index: {}]
  %s3 = inlined_call_operand.vmem [shape: bf16[16,64], index: 3, kind: input, shape index: {}]
  %s4 = inlined_call_operand.vmem [shape: bf16[16,64], index: 4, kind: input, shape index: {}]
  %s5 = inlined_call_operand.vmem [shape: bf16[1,32,64], index: 5, kind: input, shape index: {}]
  %s6 = inlined_call_operand.vmem [shape: f32[2,1,64], index: 6, kind: input, shape index: {}]
  %s7 = inlined_call_operand.vmem [shape: f32[8], index: 7, kind: input, shape index: {}]
  %s8 = inlined_call_operand.<no memory space> [shape: f32[1], index: 8, kind: input, shape index: {}]
  %s9 = inlined_call_operand.vmem [shape: bf16[16,4], index: 9, kind: input, shape index: {}]
  %s10 = inlined_call_operand.vmem [shape: f32[1,4], index: 10, kind: input, shape index: {}]
  %s11 = inlined_call_operand.hbm [shape: f32[2,4], index: 11, kind: output, shape index: {}]
  %s12 = sld [smem:[#allocation0]]
  $region66: #{tpu_custom_call.1} parent=0
    _
  %s14 = ssub.s32 1, %s12
  %s15 = scalar_select 0, %s14, %s12
  %16 = sst [smem:[#allocation2]] %s2
  %17 = sst [smem:[#allocation3]] %s8
  $region1: #{tpu_custom_call.1} parent=0
    #allocation4 [shape = 'u8[32768]{0}', space=vmem, size = 0x8000, scoped, tag = 'input window, operand 0, single buffered']
    #allocation5 [shape = 's32[1]{0}', space=sflag, size = 0x4, scoped, tag = 'scoped memory for tpu_custom_call.1']
    #allocation6 [shape = 's32[1]{0}', space=sflag, size = 0x4, scoped, tag = 'scoped memory for tpu_custom_call.1']
    #allocation7 [shape = 's32[1]{0}', space=sflag, size = 0x4, scoped, tag = 'scoped memory for tpu_custom_call.1']
    #allocation8 [shape = 's32[1]{0}', space=sflag, size = 0x4, scoped, tag = 'scoped memory for tpu_custom_call.1']
    #allocation9 [shape = 'u8[512]{0}', space=smem, size = 0x200, scoped, tag = 'input window, operand 1, single buffered']
    #allocation10 [shape = 'u8[512]{0}', space=smem, size = 0x200, scoped, tag = 'input window, operand 7, single buffered']
    #allocation11 [shape = 'u8[1024]{0}', space=vmem, size = 0x400, scoped, tag = 'output window, operand 0, single buffered']
    %18 = vsyncpa [#allocation5], 0
    %19 = vsyncpa [#allocation7], 0
    %20 = vsyncpa [#allocation8], 0
    %21 = vsyncpa [#allocation6], 0
    // Predicated region
    $region2: #{tpu_custom_call.1} parent=1 // pred_check
      _
    $region3: #{tpu_custom_call.1} parent=1 // pred_check_branch
      %23 = sbr.rel (0) target = $region5
    $region4: #{tpu_custom_call.1} parent=1 // pred_region
      %s25 = ssub.s32 1024, 1024
      %26 = vsyncadd [#allocation5], %s25
      %s27 = sshll.u32 [#allocation4], 4
      %s28 = int_to_ptr.vmem [resolvable:$true] %s27
      %33 = dma.hbm_to_vmem [thread:$0]  %s0, 1024, %s28, [#allocation5], 128, 128, 8
    $region5: #{tpu_custom_call.1} parent=1 // pred_fallthru
      _
    // Predicated region
    $region6: #{tpu_custom_call.1} parent=1 // pred_check
      _
    $region7: #{tpu_custom_call.1} parent=1 // pred_check_branch
      %35 = sbr.rel (0) target = $region9
    $region8: #{tpu_custom_call.1} parent=1 // pred_region
      %s37 = ssub.s32 16, 16
      %38 = vsyncadd [#allocation7], %s37
      %41 = dma.hbm_to_smem %s1, 16, [#allocation9], [#allocation7]
    $region9: #{tpu_custom_call.1} parent=1 // pred_fallthru
      _
    // Predicated region
    $region10: #{tpu_custom_call.1} parent=1 // pred_check
      _
    $region11: #{tpu_custom_call.1} parent=1 // pred_check_branch
      %43 = sbr.rel (0) target = $region13
    $region12: #{tpu_custom_call.1} parent=1 // pred_region
      _
    $region13: #{tpu_custom_call.1} parent=1 // pred_fallthru
      _
    // Predicated region
    $region14: #{tpu_custom_call.1} parent=1 // pred_check
      _
    $region15: #{tpu_custom_call.1} parent=1 // pred_check_branch
      %45 = sbr.rel (0) target = $region17
    $region16: #{tpu_custom_call.1} parent=1 // pred_region
      _
    $region17: #{tpu_custom_call.1} parent=1 // pred_fallthru
      _
    // Predicated region
    $region18: #{tpu_custom_call.1} parent=1 // pred_check
      _
    $region19: #{tpu_custom_call.1} parent=1 // pred_check_branch
      %47 = sbr.rel (0) target = $region21
    $region20: #{tpu_custom_call.1} parent=1 // pred_region
      _
    $region21: #{tpu_custom_call.1} parent=1 // pred_fallthru
      _
    // Predicated region
    $region22: #{tpu_custom_call.1} parent=1 // pred_check
      _
    $region23: #{tpu_custom_call.1} parent=1 // pred_check_branch
      %49 = sbr.rel (0) target = $region25
    $region24: #{tpu_custom_call.1} parent=1 // pred_region
      _
    $region25: #{tpu_custom_call.1} parent=1 // pred_fallthru
      _
    // Predicated region
    $region26: #{tpu_custom_call.1} parent=1 // pred_check
      _
    $region27: #{tpu_custom_call.1} parent=1 // pred_check_branch
      %51 = sbr.rel (0) target = $region29
    $region28: #{tpu_custom_call.1} parent=1 // pred_region
      _
    $region29: #{tpu_custom_call.1} parent=1 // pred_fallthru
      _
    // Predicated region
    $region30: #{tpu_custom_call.1} parent=1 // pred_check
      _
    $region31: #{tpu_custom_call.1} parent=1 // pred_check_branch
      %53 = sbr.rel (0) target = $region33
    $region32: #{tpu_custom_call.1} parent=1 // pred_region
      %s55 = ssub.s32 16, 16
      %56 = vsyncadd [#allocation8], %s55
      %s58 = sshll.u32 %s7, 4
      %s59 = int_to_ptr.vmem [resolvable:$true] %s58
      %61 = dma.vmem_to_smem %s59, 16, [#allocation10], [#allocation8]
    $region33: #{tpu_custom_call.1} parent=1 // pred_fallthru
      _
    // Predicated region
    $region34: #{tpu_custom_call.1} parent=1 // pred_check
      _
    $region35: #{tpu_custom_call.1} parent=1 // pred_check_branch
      %63 = sbr.rel (0) target = $region37
    $region36: #{tpu_custom_call.1} parent=1 // pred_region
      _
    $region37: #{tpu_custom_call.1} parent=1 // pred_fallthru
      _
    // Predicated region
    $region38: #{tpu_custom_call.1} parent=1 // pred_check
      _
    $region39: #{tpu_custom_call.1} parent=1 // pred_check_branch
      %65 = sbr.rel (0) target = $region41
    $region40: #{tpu_custom_call.1} parent=1 // pred_region
      _
    $region41: #{tpu_custom_call.1} parent=1 // pred_fallthru
      _
    // Predicated region
    $region42: #{tpu_custom_call.1} parent=1 // pred_check
      _
    $region43: #{tpu_custom_call.1} parent=1 // pred_check_branch
      %67 = sbr.rel (0) target = $region45
    $region44: #{tpu_custom_call.1} parent=1 // pred_region
      _
    $region45: #{tpu_custom_call.1} parent=1 // pred_fallthru
      _
    // Predicated region
    $region46: #{tpu_custom_call.1} parent=1 // pred_check
      _
    $region47: #{tpu_custom_call.1} parent=1 // pred_check_branch
      %69 = sbr.rel (0) target = $region49
    $region48: #{tpu_custom_call.1} parent=1 // pred_region
      %70 = dma.done [#allocation5], 1024
    $region49: #{tpu_custom_call.1} parent=1 // pred_fallthru
      _
    // Predicated region
    $region50: #{tpu_custom_call.1} parent=1 // pred_check
      _
    $region51: #{tpu_custom_call.1} parent=1 // pred_check_branch
      %72 = sbr.rel (0) target = $region53
    $region52: #{tpu_custom_call.1} parent=1 // pred_region
      %73 = dma.done [#allocation7], 16
    $region53: #{tpu_custom_call.1} parent=1 // pred_fallthru
      _
    // Predicated region
    $region54: #{tpu_custom_call.1} parent=1 // pred_check
      _
    $region55: #{tpu_custom_call.1} parent=1 // pred_check_branch
      %75 = sbr.rel (0) target = $region57
    $region56: #{tpu_custom_call.1} parent=1 // pred_region
      %76 = dma.done [#allocation8], 16
    $region57: #{tpu_custom_call.1} parent=1 // pred_fallthru
      _
    %77 = sfence
    %s79 = sld [smem:[#allocation9]]
    %v80 = vld [vmem:[#allocation4] sm:$0xff]
    %v81 = vld [vmem:[#allocation4 + $0x8] sm:$0xff]
    %v82 = vstv %s79
    %v83 = vmul.f32 %v82, %v80
    %v84 = vmul.f32 %v82, %v81
    %s85 = sld [smem:[#allocation2]]
    %v86 = vstv %s85
    %v87 = vadd.f32 %v83, %v86
    %v88 = vadd.f32 %v84, %v86
    %s89 = sld [smem:[#allocation9 + $0x1]]
    %s90 = scalar_lea.vmem [#allocation4], 16
    %v91 = vld [vmem:[%s90] sm:$0xff]
    %v92 = vld [vmem:[%s90 + $0x8] sm:$0xff]
    %v93 = vstv %s89
    %v94 = vmul.f32 %v93, %v91
    %v95 = vmul.f32 %v93, %v92
    %v96 = vadd.f32 %v87, %v94
    %v97 = vadd.f32 %v88, %v95
    %s98 = sld [smem:[#allocation9 + $0x2]]
    %s99 = scalar_lea.vmem [#allocation4], 32
    %v100 = vld [vmem:[%s99] sm:$0xff]
    %v101 = vld [vmem:[%s99 + $0x8] sm:$0xff]
    %v102 = vstv %s98
    %v103 = vmul.f32 %v102, %v100
    %v104 = vmul.f32 %v102, %v101
    %v105 = vadd.f32 %v96, %v103
    %v106 = vadd.f32 %v97, %v104
    %s107 = sld [smem:[#allocation9 + $0x3]]
    %s108 = scalar_lea.vmem [#allocation4], 48
    %v109 = vld [vmem:[%s108] sm:$0xff]
    %v110 = vld [vmem:[%s108 + $0x8] sm:$0xff]
    %v111 = vstv %s107
    %v112 = vmul.f32 %v111, %v109
    %v113 = vmul.f32 %v111, %v110
    %v114 = vadd.f32 %v105, %v112
    %v115 = vadd.f32 %v106, %v113
    %v116 = vpack.c.bf16 %v115, %v114
    %v117 = vld [vmem:[%s3] sm:$0xf]
    %v118 = vld [vmem:[%s3 + $0x4] sm:$0xf]
    %v119 = vld [vmem:[%s6] sm:$0x1]
    %v121 = vlaneseq
    %v122 = vshrl.u32 %v121, 7
    %v123 = vsub.s32 0, %v122
    %v124 = vrot.slane %v119, %v123
    %v128 = vunpack.c.l.b16 %v117
    %v129 = vunpack.c.l.b16 %v118
    %v130 = vpack.c.b16 %v129, %v128
    %vm132 = vcmask 130048
    %v134 = vsel %vm132, %v116, 0
    %136 = vmatprep.subr.bf16.mxu0 0
    %137 = vmatpush1.bf16.msra.mxu0 %v130
    %138 = vmatprep.subr.bf16.mxu0 0
    %139 = vmatpush1.bf16.msra.mxu0 0
    %140 = vmatprep.subr.bf16.mxu0 0
    %141 = vmatpush1.bf16.msra.mxu0 0
    %142 = vmatprep.subr.bf16.mxu0 0
    %143 = vmatpush1.bf16.msra.mxu0 0
    %144 = vmatprep.subr.bf16.mxu0 0
    %145 = vmatpush1.bf16.msra.mxu0 0
    %146 = vmatprep.subr.bf16.mxu0 0
    %147 = vmatpush1.bf16.msra.mxu0 0
    %148 = vmatprep.subr.bf16.mxu0 0
    %149 = vmatpush1.bf16.msra.mxu0 0
    %150 = vmatprep.subr.bf16.mxu0 0
    %151 = vmatpush1.bf16.msra.mxu0 0
    %152 = vmatprep.subr.bf16.mxu0 0
    %153 = vmatpush1.bf16.msra.mxu0 0
    %154 = vmatprep.subr.bf16.mxu0 0
    %155 = vmatpush1.bf16.msra.mxu0 0
    %156 = vmatprep.subr.bf16.mxu0 0
    %157 = vmatpush1.bf16.msra.mxu0 0
    %158 = vmatprep.subr.bf16.mxu0 0
    %159 = vmatpush1.bf16.msra.mxu0 0
    %160 = vmatprep.subr.bf16.mxu0 0
    %161 = vmatpush1.bf16.msra.mxu0 0
    %162 = vmatprep.subr.bf16.mxu0 0
    %163 = vmatpush1.bf16.msra.mxu0 0
    %164 = vmatprep.subr.bf16.mxu0 0
    %165 = vmatpush1.bf16.msra.mxu0 0
    %166 = vmatprep.subr.bf16.mxu0 0
    %167 = vmatpush1.bf16.msra.mxu0 0
    %168 = vmatprep.mubr.bf16.mxu0 0
    %169 = vmatmul.mubr.bf16.gmra.mrb[0].mxu0 %v134
    %v170 = vpop.f32.mrb[0].mxu0
    %v171 = vadd.f32 %v124, %v170
    %v172 = vpop.f32.mrb[0].mxu0
    %v173 = vpop.f32.mrb[0].mxu0
    %v174 = vadd.f32 %v124, %v173
    %v175 = vpop.f32.mrb[0].mxu0
    %176 = vdwg.mxu0
    %s177 = scalar_lea.vmem %s6, 1
    %v178 = vld [vmem:[%s177] sm:$0x1]
    %v180 = vlaneseq
    %v181 = vshrl.u32 %v180, 7
    %v182 = vsub.s32 0, %v181
    %v183 = vrot.slane %v178, %v182
    %v185 = vld [vmem:[%s4] sm:$0xf]
    %v186 = vld [vmem:[%s4 + $0x4] sm:$0xf]
    %v189 = vunpack.c.l.b16 %v185
    %v190 = vunpack.c.l.b16 %v186
    %v191 = vpack.c.b16 %v190, %v189
    %v194 = vsel %vm132, 0, 0
    %196 = vmatprep.subr.bf16.mxu0 0
    %197 = vmatpush1.bf16.msra.mxu0 %v191
    %198 = vmatprep.subr.bf16.mxu0 0
    %199 = vmatpush1.bf16.msra.mxu0 0
    %200 = vmatprep.subr.bf16.mxu0 0
    %201 = vmatpush1.bf16.msra.mxu0 0
    %202 = vmatprep.subr.bf16.mxu0 0
    %203 = vmatpush1.bf16.msra.mxu0 0
    %204 = vmatprep.subr.bf16.mxu0 0
    %205 = vmatpush1.bf16.msra.mxu0 0
    %206 = vmatprep.subr.bf16.mxu0 0
    %207 = vmatpush1.bf16.msra.mxu0 0
    %208 = vmatprep.subr.bf16.mxu0 0
    %209 = vmatpush1.bf16.msra.mxu0 0
    %210 = vmatprep.subr.bf16.mxu0 0
    %211 = vmatpush1.bf16.msra.mxu0 0
    %212 = vmatprep.subr.bf16.mxu0 0
    %213 = vmatpush1.bf16.msra.mxu0 0
    %214 = vmatprep.subr.bf16.mxu0 0
    %215 = vmatpush1.bf16.msra.mxu0 0
    %216 = vmatprep.subr.bf16.mxu0 0
    %217 = vmatpush1.bf16.msra.mxu0 0
    %218 = vmatprep.subr.bf16.mxu0 0
    %219 = vmatpush1.bf16.msra.mxu0 0
    %220 = vmatprep.subr.bf16.mxu0 0
    %221 = vmatpush1.bf16.msra.mxu0 0
    %222 = vmatprep.subr.bf16.mxu0 0
    %223 = vmatpush1.bf16.msra.mxu0 0
    %224 = vmatprep.subr.bf16.mxu0 0
    %225 = vmatpush1.bf16.msra.mxu0 0
    %226 = vmatprep.subr.bf16.mxu0 0
    %227 = vmatpush1.bf16.msra.mxu0 0
    %228 = vmatprep.mubr.bf16.mxu0 0
    %229 = vmatmul.mubr.bf16.gmra.mrb[0].mxu0 %v194
    %v230 = vpop.f32.mrb[0].mxu0
    %v231 = vadd.f32 0.0, %v230
    %v232 = vpop.f32.mrb[0].mxu0
    %v233 = vpop.f32.mrb[0].mxu0
    %v234 = vpop.f32.mrb[0].mxu0
    %235 = vdwg.mxu0
    %v236 = vadd.f32 %v171, %v231
    %v237 = vtanh.pop %v236
    %v238 = vmul.f32 %v237, 0.5
    %v239 = vadd.f32 %v238, 0.5
    %v240 = vmul.f32 %v239, 0.0
    %242 = vrot.lane.b32.xlu0 %v237, 80
    %v243 = vpop.permute.xlu0 %242
    %v245 = vmul.f32 %v239, %v243
    %247 = vrot.lane.b32.xlu0 %v245, 16
    %v248 = vpop.permute.xlu0 %247
    %v250 = vadd.f32 %v240, %v248
    %v251 = vtanh.pop %v250
    %253 = vrot.lane.b32.xlu0 %v251, 16
    %v254 = vpop.permute.xlu0 %253
    %v256 = vmul.f32 %v239, %v254
    %258 = vrot.lane.b32.xlu0 %v256, 96
    %v259 = vpop.permute.xlu0 %258
    %v261 = vsel %vm132, %v259, 0.0
    %v262 = vpack.c.bf16 %v261, %v261
    %v263 = vld [vmem:[%s5] sm:$0xf]
    %v264 = vld [vmem:[%s5 + $0x4] sm:$0xf]
    %v265 = vld [vmem:[%s5 + $0x8] sm:$0xf]
    %v266 = vld [vmem:[%s5 + $0xc] sm:$0xf]
    %v271 = vunpack.c.l.b16 %v263
    %v272 = vunpack.c.l.b16 %v264
    %v273 = vunpack.c.l.b16 %v265
    %v274 = vunpack.c.l.b16 %v266
    %v275 = vpack.c.b16 %v272, %v271
    %v276 = vpack.c.b16 %v274, %v273
    %vm279 = vcmask 261120
    %v281 = vsel %vm279, %v262, 0
    %283 = vmatprep.subr.bf16.mxu0 0
    %284 = vmatpush1.bf16.msra.mxu0 %v275
    %285 = vmatprep.subr.bf16.mxu0 0
    %286 = vmatpush1.bf16.msra.mxu0 %v276
    %287 = vmatprep.subr.bf16.mxu0 0
    %288 = vmatpush1.bf16.msra.mxu0 0
    %289 = vmatprep.subr.bf16.mxu0 0
    %290 = vmatpush1.bf16.msra.mxu0 0
    %291 = vmatprep.subr.bf16.mxu0 0
    %292 = vmatpush1.bf16.msra.mxu0 0
    %293 = vmatprep.subr.bf16.mxu0 0
    %294 = vmatpush1.bf16.msra.mxu0 0
    %295 = vmatprep.subr.bf16.mxu0 0
    %296 = vmatpush1.bf16.msra.mxu0 0
    %297 = vmatprep.subr.bf16.mxu0 0
    %298 = vmatpush1.bf16.msra.mxu0 0
    %299 = vmatprep.subr.bf16.mxu0 0
    %300 = vmatpush1.bf16.msra.mxu0 0
    %301 = vmatprep.subr.bf16.mxu0 0
    %302 = vmatpush1.bf16.msra.mxu0 0
    %303 = vmatprep.subr.bf16.mxu0 0
    %304 = vmatpush1.bf16.msra.mxu0 0
    %305 = vmatprep.subr.bf16.mxu0 0
    %306 = vmatpush1.bf16.msra.mxu0 0
    %307 = vmatprep.subr.bf16.mxu0 0
    %308 = vmatpush1.bf16.msra.mxu0 0
    %309 = vmatprep.subr.bf16.mxu0 0
    %310 = vmatpush1.bf16.msra.mxu0 0
    %311 = vmatprep.subr.bf16.mxu0 0
    %312 = vmatpush1.bf16.msra.mxu0 0
    %313 = vmatprep.subr.bf16.mxu0 0
    %314 = vmatpush1.bf16.msra.mxu0 0
    %315 = vmatprep.mubr.bf16.mxu0 0
    %316 = vmatmul.mubr.bf16.gmra.mrb[0].mxu0 %v281
    %v317 = vpop.f32.mrb[0].mxu0
    %v318 = vadd.f32 %v183, %v317
    %v319 = vpop.f32.mrb[0].mxu0
    %v320 = vpop.f32.mrb[0].mxu0
    %v321 = vpop.f32.mrb[0].mxu0
    %322 = vdwg.mxu0
    %v323 = vtanh.pop %v318
    %v324 = vmul.f32 %v323, 0.5
    %v325 = vadd.f32 %v324, 0.5
    %v326 = vmul.f32 %v325, 0.0
    %328 = vrot.lane.b32.xlu0 %v323, 80
    %v329 = vpop.permute.xlu0 %328
    %v331 = vmul.f32 %v325, %v329
    %333 = vrot.lane.b32.xlu0 %v331, 16
    %v334 = vpop.permute.xlu0 %333
    %v336 = vadd.f32 %v326, %v334
    %v337 = vtanh.pop %v336
    %339 = vrot.lane.b32.xlu0 %v337, 16
    %v340 = vpop.permute.xlu0 %339
    %v342 = vmul.f32 %v325, %v340
    %s343 = sld [smem:[#allocation10]]
    %v344 = vstv %s343
    %v345 = vmul.f32 %v344, %v342
    %v346 = vadd.f32 %v345, 0.0
    %v347 = vpack.c.bf16 %v256, %v256
    %349 = vrot.lane.b32.xlu0 %v347, 96
    %v350 = vpop.permute.xlu0 %349
    %v352 = vsel %vm132, %v350, 0
    %354 = vmatprep.subr.bf16.mxu0 0
    %355 = vmatpush1.bf16.msra.mxu0 %v191
    %356 = vmatprep.subr.bf16.mxu0 0
    %357 = vmatpush1.bf16.msra.mxu0 0
    %358 = vmatprep.subr.bf16.mxu0 0
    %359 = vmatpush1.bf16.msra.mxu0 0
    %360 = vmatprep.subr.bf16.mxu0 0
    %361 = vmatpush1.bf16.msra.mxu0 0
    %362 = vmatprep.subr.bf16.mxu0 0
    %363 = vmatpush1.bf16.msra.mxu0 0
    %364 = vmatprep.subr.bf16.mxu0 0
    %365 = vmatpush1.bf16.msra.mxu0 0
    %366 = vmatprep.subr.bf16.mxu0 0
    %367 = vmatpush1.bf16.msra.mxu0 0
    %368 = vmatprep.subr.bf16.mxu0 0
    %369 = vmatpush1.bf16.msra.mxu0 0
    %370 = vmatprep.subr.bf16.mxu0 0
    %371 = vmatpush1.bf16.msra.mxu0 0
    %372 = vmatprep.subr.bf16.mxu0 0
    %373 = vmatpush1.bf16.msra.mxu0 0
    %374 = vmatprep.subr.bf16.mxu0 0
    %375 = vmatpush1.bf16.msra.mxu0 0
    %376 = vmatprep.subr.bf16.mxu0 0
    %377 = vmatpush1.bf16.msra.mxu0 0
    %378 = vmatprep.subr.bf16.mxu0 0
    %379 = vmatpush1.bf16.msra.mxu0 0
    %380 = vmatprep.subr.bf16.mxu0 0
    %381 = vmatpush1.bf16.msra.mxu0 0
    %382 = vmatprep.subr.bf16.mxu0 0
    %383 = vmatpush1.bf16.msra.mxu0 0
    %384 = vmatprep.subr.bf16.mxu0 0
    %385 = vmatpush1.bf16.msra.mxu0 0
    %386 = vmatprep.mubr.bf16.mxu0 0
    %387 = vmatmul.mubr.bf16.gmra.mrb[0].mxu0 %v352
    %v388 = vpop.f32.mrb[0].mxu0
    %v389 = vadd.f32 0.0, %v388
    %v390 = vpop.f32.mrb[0].mxu0
    %v391 = vpop.f32.mrb[0].mxu0
    %v392 = vpop.f32.mrb[0].mxu0
    %393 = vdwg.mxu0
    %v395 = vrot.slane %v389, 6
    %v397 = vadd.f32 %v171, %v395
    %v398 = vtanh.pop %v397
    %v399 = vmul.f32 %v398, 0.5
    %v400 = vadd.f32 %v399, 0.5
    %v402 = vrot.slane %v250, 6
    %v404 = vmul.f32 %v400, %v402
    %406 = vrot.lane.b32.xlu0 %v398, 80
    %v407 = vpop.permute.xlu0 %406
    %v409 = vmul.f32 %v400, %v407
    %411 = vrot.lane.b32.xlu0 %v409, 16
    %v412 = vpop.permute.xlu0 %411
    %v414 = vadd.f32 %v404, %v412
    %v415 = vtanh.pop %v414
    %417 = vrot.lane.b32.xlu0 %v415, 16
    %v418 = vpop.permute.xlu0 %417
    %v420 = vmul.f32 %v400, %v418
    %422 = vrot.lane.b32.xlu0 %v420, 96
    %v423 = vpop.permute.xlu0 %422
    %v426 = vrot.slane %v342, 6
    %427 = vrot.lane.b32.xlu0 %v426, 112
    %v428 = vpop.permute.xlu0 %427
    %v430 = vsel %vm132, %v423, %v428
    %v431 = vpack.c.bf16 %v430, %v430
    %v433 = vrot.slane %v431, 1
    %v435 = vsel %vm279, %v433, 0
    %437 = vmatprep.subr.bf16.mxu0 0
    %438 = vmatpush1.bf16.msra.mxu0 %v275
    %439 = vmatprep.subr.bf16.mxu0 0
    %440 = vmatpush1.bf16.msra.mxu0 %v276
    %441 = vmatprep.subr.bf16.mxu0 0
    %442 = vmatpush1.bf16.msra.mxu0 0
    %443 = vmatprep.subr.bf16.mxu0 0
    %444 = vmatpush1.bf16.msra.mxu0 0
    %445 = vmatprep.subr.bf16.mxu0 0
    %446 = vmatpush1.bf16.msra.mxu0 0
    %447 = vmatprep.subr.bf16.mxu0 0
    %448 = vmatpush1.bf16.msra.mxu0 0
    %449 = vmatprep.subr.bf16.mxu0 0
    %450 = vmatpush1.bf16.msra.mxu0 0
    %451 = vmatprep.subr.bf16.mxu0 0
    %452 = vmatpush1.bf16.msra.mxu0 0
    %453 = vmatprep.subr.bf16.mxu0 0
    %454 = vmatpush1.bf16.msra.mxu0 0
    %455 = vmatprep.subr.bf16.mxu0 0
    %456 = vmatpush1.bf16.msra.mxu0 0
    %457 = vmatprep.subr.bf16.mxu0 0
    %458 = vmatpush1.bf16.msra.mxu0 0
    %459 = vmatprep.subr.bf16.mxu0 0
    %460 = vmatpush1.bf16.msra.mxu0 0
    %461 = vmatprep.subr.bf16.mxu0 0
    %462 = vmatpush1.bf16.msra.mxu0 0
    %463 = vmatprep.subr.bf16.mxu0 0
    %464 = vmatpush1.bf16.msra.mxu0 0
    %465 = vmatprep.subr.bf16.mxu0 0
    %466 = vmatpush1.bf16.msra.mxu0 0
    %467 = vmatprep.subr.bf16.mxu0 0
    %468 = vmatpush1.bf16.msra.mxu0 0
    %469 = vmatprep.mubr.bf16.mxu0 0
    %470 = vmatmul.mubr.bf16.gmra.mrb[0].mxu0 %v435
    %v471 = vpop.f32.mrb[0].mxu0
    %v472 = vadd.f32 %v183, %v471
    %v473 = vpop.f32.mrb[0].mxu0
    %v474 = vpop.f32.mrb[0].mxu0
    %v475 = vpop.f32.mrb[0].mxu0
    %476 = vdwg.mxu0
    %v477 = vtanh.pop %v472
    %v478 = vmul.f32 %v477, 0.5
    %v479 = vadd.f32 %v478, 0.5
    %v480 = vmul.f32 %v479, %v336
    %482 = vrot.lane.b32.xlu0 %v477, 80
    %v483 = vpop.permute.xlu0 %482
    %v485 = vmul.f32 %v479, %v483
    %487 = vrot.lane.b32.xlu0 %v485, 16
    %v488 = vpop.permute.xlu0 %487
    %v490 = vadd.f32 %v480, %v488
    %v491 = vtanh.pop %v490
    %493 = vrot.lane.b32.xlu0 %v491, 16
    %v494 = vpop.permute.xlu0 %493
    %v496 = vmul.f32 %v479, %v494
    %s497 = sld [smem:[#allocation10 + $0x1]]
    %v498 = vstv %s497
    %v499 = vmul.f32 %v498, %v496
    %v500 = vadd.f32 %v346, %v499
    %v501 = vpack.c.bf16 %v420, %v420
    %v503 = vrot.slane %v501, 1
    %504 = vrot.lane.b32.xlu0 %v503, 96
    %v505 = vpop.permute.xlu0 %504
    %v507 = vsel %vm132, %v505, 0
    %509 = vmatprep.subr.bf16.mxu0 0
    %510 = vmatpush1.bf16.msra.mxu0 %v191
    %511 = vmatprep.subr.bf16.mxu0 0
    %512 = vmatpush1.bf16.msra.mxu0 0
    %513 = vmatprep.subr.bf16.mxu0 0
    %514 = vmatpush1.bf16.msra.mxu0 0
    %515 = vmatprep.subr.bf16.mxu0 0
    %516 = vmatpush1.bf16.msra.mxu0 0
    %517 = vmatprep.subr.bf16.mxu0 0
    %518 = vmatpush1.bf16.msra.mxu0 0
    %519 = vmatprep.subr.bf16.mxu0 0
    %520 = vmatpush1.bf16.msra.mxu0 0
    %521 = vmatprep.subr.bf16.mxu0 0
    %522 = vmatpush1.bf16.msra.mxu0 0
    %523 = vmatprep.subr.bf16.mxu0 0
    %524 = vmatpush1.bf16.msra.mxu0 0
    %525 = vmatprep.subr.bf16.mxu0 0
    %526 = vmatpush1.bf16.msra.mxu0 0
    %527 = vmatprep.subr.bf16.mxu0 0
    %528 = vmatpush1.bf16.msra.mxu0 0
    %529 = vmatprep.subr.bf16.mxu0 0
    %530 = vmatpush1.bf16.msra.mxu0 0
    %531 = vmatprep.subr.bf16.mxu0 0
    %532 = vmatpush1.bf16.msra.mxu0 0
    %533 = vmatprep.subr.bf16.mxu0 0
    %534 = vmatpush1.bf16.msra.mxu0 0
    %535 = vmatprep.subr.bf16.mxu0 0
    %536 = vmatpush1.bf16.msra.mxu0 0
    %537 = vmatprep.subr.bf16.mxu0 0
    %538 = vmatpush1.bf16.msra.mxu0 0
    %539 = vmatprep.subr.bf16.mxu0 0
    %540 = vmatpush1.bf16.msra.mxu0 0
    %541 = vmatprep.mubr.bf16.mxu0 0
    %542 = vmatmul.mubr.bf16.gmra.mrb[0].mxu0 %v507
    %v543 = vpop.f32.mrb[0].mxu0
    %v544 = vadd.f32 0.0, %v543
    %v545 = vpop.f32.mrb[0].mxu0
    %v546 = vpop.f32.mrb[0].mxu0
    %v547 = vpop.f32.mrb[0].mxu0
    %548 = vdwg.mxu0
    %v550 = vrot.slane %v544, 4
    %v552 = vadd.f32 %v171, %v550
    %v553 = vtanh.pop %v552
    %v554 = vmul.f32 %v553, 0.5
    %v555 = vadd.f32 %v554, 0.5
    %v557 = vrot.slane %v414, 6
    %v559 = vmul.f32 %v555, %v557
    %561 = vrot.lane.b32.xlu0 %v553, 80
    %v562 = vpop.permute.xlu0 %561
    %v564 = vmul.f32 %v555, %v562
    %566 = vrot.lane.b32.xlu0 %v564, 16
    %v567 = vpop.permute.xlu0 %566
    %v569 = vadd.f32 %v559, %v567
    %v570 = vtanh.pop %v569
    %572 = vrot.lane.b32.xlu0 %v570, 16
    %v573 = vpop.permute.xlu0 %572
    %v575 = vmul.f32 %v555, %v573
    %577 = vrot.lane.b32.xlu0 %v575, 96
    %v578 = vpop.permute.xlu0 %577
    %v581 = vrot.slane %v496, 4
    %582 = vrot.lane.b32.xlu0 %v581, 112
    %v583 = vpop.permute.xlu0 %582
    %v585 = vsel %vm132, %v578, %v583
    %v586 = vpack.c.bf16 %v585, %v585
    %v588 = vrot.slane %v586, 2
    %v590 = vsel %vm279, %v588, 0
    %592 = vmatprep.subr.bf16.mxu0 0
    %593 = vmatpush1.bf16.msra.mxu0 %v275
    %594 = vmatprep.subr.bf16.mxu0 0
    %595 = vmatpush1.bf16.msra.mxu0 %v276
    %596 = vmatprep.subr.bf16.mxu0 0
    %597 = vmatpush1.bf16.msra.mxu0 0
    %598 = vmatprep.subr.bf16.mxu0 0
    %599 = vmatpush1.bf16.msra.mxu0 0
    %600 = vmatprep.subr.bf16.mxu0 0
    %601 = vmatpush1.bf16.msra.mxu0 0
    %602 = vmatprep.subr.bf16.mxu0 0
    %603 = vmatpush1.bf16.msra.mxu0 0
    %604 = vmatprep.subr.bf16.mxu0 0
    %605 = vmatpush1.bf16.msra.mxu0 0
    %606 = vmatprep.subr.bf16.mxu0 0
    %607 = vmatpush1.bf16.msra.mxu0 0
    %608 = vmatprep.subr.bf16.mxu0 0
    %609 = vmatpush1.bf16.msra.mxu0 0
    %610 = vmatprep.subr.bf16.mxu0 0
    %611 = vmatpush1.bf16.msra.mxu0 0
    %612 = vmatprep.subr.bf16.mxu0 0
    %613 = vmatpush1.bf16.msra.mxu0 0
    %614 = vmatprep.subr.bf16.mxu0 0
    %615 = vmatpush1.bf16.msra.mxu0 0
    %616 = vmatprep.subr.bf16.mxu0 0
    %617 = vmatpush1.bf16.msra.mxu0 0
    %618 = vmatprep.subr.bf16.mxu0 0
    %619 = vmatpush1.bf16.msra.mxu0 0
    %620 = vmatprep.subr.bf16.mxu0 0
    %621 = vmatpush1.bf16.msra.mxu0 0
    %622 = vmatprep.subr.bf16.mxu0 0
    %623 = vmatpush1.bf16.msra.mxu0 0
    %624 = vmatprep.mubr.bf16.mxu0 0
    %625 = vmatmul.mubr.bf16.gmra.mrb[0].mxu0 %v590
    %v626 = vpop.f32.mrb[0].mxu0
    %v627 = vadd.f32 %v183, %v626
    %v628 = vpop.f32.mrb[0].mxu0
    %v629 = vpop.f32.mrb[0].mxu0
    %v630 = vpop.f32.mrb[0].mxu0
    %631 = vdwg.mxu0
    %v632 = vtanh.pop %v627
    %v633 = vmul.f32 %v632, 0.5
    %v634 = vadd.f32 %v633, 0.5
    %v635 = vmul.f32 %v634, %v490
    %637 = vrot.lane.b32.xlu0 %v632, 80
    %v638 = vpop.permute.xlu0 %637
    %v640 = vmul.f32 %v634, %v638
    %642 = vrot.lane.b32.xlu0 %v640, 16
    %v643 = vpop.permute.xlu0 %642
    %v645 = vadd.f32 %v635, %v643
    %v646 = vtanh.pop %v645
    %648 = vrot.lane.b32.xlu0 %v646, 16
    %v649 = vpop.permute.xlu0 %648
    %v651 = vmul.f32 %v634, %v649
    %s652 = sld [smem:[#allocation10 + $0x2]]
    %v653 = vstv %s652
    %v654 = vmul.f32 %v653, %v651
    %v655 = vadd.f32 %v500, %v654
    %v656 = vpack.c.bf16 %v575, %v575
    %v658 = vrot.slane %v656, 2
    %659 = vrot.lane.b32.xlu0 %v658, 96
    %v660 = vpop.permute.xlu0 %659
    %v662 = vsel %vm132, %v660, 0
    %664 = vmatprep.subr.bf16.mxu0 0
    %665 = vmatpush1.bf16.msra.mxu0 %v191
    %666 = vmatprep.subr.bf16.mxu0 0
    %667 = vmatpush1.bf16.msra.mxu0 0
    %668 = vmatprep.subr.bf16.mxu0 0
    %669 = vmatpush1.bf16.msra.mxu0 0
    %670 = vmatprep.subr.bf16.mxu0 0
    %671 = vmatpush1.bf16.msra.mxu0 0
    %672 = vmatprep.subr.bf16.mxu0 0
    %673 = vmatpush1.bf16.msra.mxu0 0
    %674 = vmatprep.subr.bf16.mxu0 0
    %675 = vmatpush1.bf16.msra.mxu0 0
    %676 = vmatprep.subr.bf16.mxu0 0
    %677 = vmatpush1.bf16.msra.mxu0 0
    %678 = vmatprep.subr.bf16.mxu0 0
    %679 = vmatpush1.bf16.msra.mxu0 0
    %680 = vmatprep.subr.bf16.mxu0 0
    %681 = vmatpush1.bf16.msra.mxu0 0
    %682 = vmatprep.subr.bf16.mxu0 0
    %683 = vmatpush1.bf16.msra.mxu0 0
    %684 = vmatprep.subr.bf16.mxu0 0
    %685 = vmatpush1.bf16.msra.mxu0 0
    %686 = vmatprep.subr.bf16.mxu0 0
    %687 = vmatpush1.bf16.msra.mxu0 0
    %688 = vmatprep.subr.bf16.mxu0 0
    %689 = vmatpush1.bf16.msra.mxu0 0
    %690 = vmatprep.subr.bf16.mxu0 0
    %691 = vmatpush1.bf16.msra.mxu0 0
    %692 = vmatprep.subr.bf16.mxu0 0
    %693 = vmatpush1.bf16.msra.mxu0 0
    %694 = vmatprep.subr.bf16.mxu0 0
    %695 = vmatpush1.bf16.msra.mxu0 0
    %696 = vmatprep.mubr.bf16.mxu0 0
    %697 = vmatmul.mubr.bf16.gmra.mrb[0].mxu0 %v662
    %v698 = vpop.f32.mrb[0].mxu0
    %v699 = vadd.f32 0.0, %v698
    %v700 = vpop.f32.mrb[0].mxu0
    %v701 = vpop.f32.mrb[0].mxu0
    %v702 = vpop.f32.mrb[0].mxu0
    %703 = vdwg.mxu0
    %v705 = vrot.slane %v699, 2
    %v707 = vadd.f32 %v171, %v705
    %v708 = vtanh.pop %v707
    %v709 = vmul.f32 %v708, 0.5
    %v710 = vadd.f32 %v709, 0.5
    %v712 = vrot.slane %v569, 6
    %v714 = vmul.f32 %v710, %v712
    %716 = vrot.lane.b32.xlu0 %v708, 80
    %v717 = vpop.permute.xlu0 %716
    %v719 = vmul.f32 %v710, %v717
    %721 = vrot.lane.b32.xlu0 %v719, 16
    %v722 = vpop.permute.xlu0 %721
    %v724 = vadd.f32 %v714, %v722
    %v725 = vtanh.pop %v724
    %727 = vrot.lane.b32.xlu0 %v725, 16
    %v728 = vpop.permute.xlu0 %727
    %v730 = vmul.f32 %v710, %v728
    %732 = vrot.lane.b32.xlu0 %v730, 96
    %v733 = vpop.permute.xlu0 %732
    %v736 = vrot.slane %v651, 2
    %737 = vrot.lane.b32.xlu0 %v736, 112
    %v738 = vpop.permute.xlu0 %737
    %v740 = vsel %vm132, %v733, %v738
    %v741 = vpack.c.bf16 %v740, %v740
    %v743 = vrot.slane %v741, 3
    %v745 = vsel %vm279, %v743, 0
    %747 = vmatprep.subr.bf16.mxu0 0
    %748 = vmatpush1.bf16.msra.mxu0 %v275
    %749 = vmatprep.subr.bf16.mxu0 0
    %750 = vmatpush1.bf16.msra.mxu0 %v276
    %751 = vmatprep.subr.bf16.mxu0 0
    %752 = vmatpush1.bf16.msra.mxu0 0
    %753 = vmatprep.subr.bf16.mxu0 0
    %754 = vmatpush1.bf16.msra.mxu0 0
    %755 = vmatprep.subr.bf16.mxu0 0
    %756 = vmatpush1.bf16.msra.mxu0 0
    %757 = vmatprep.subr.bf16.mxu0 0
    %758 = vmatpush1.bf16.msra.mxu0 0
    %759 = vmatprep.subr.bf16.mxu0 0
    %760 = vmatpush1.bf16.msra.mxu0 0
    %761 = vmatprep.subr.bf16.mxu0 0
    %762 = vmatpush1.bf16.msra.mxu0 0
    %763 = vmatprep.subr.bf16.mxu0 0
    %764 = vmatpush1.bf16.msra.mxu0 0
    %765 = vmatprep.subr.bf16.mxu0 0
    %766 = vmatpush1.bf16.msra.mxu0 0
    %767 = vmatprep.subr.bf16.mxu0 0
    %768 = vmatpush1.bf16.msra.mxu0 0
    %769 = vmatprep.subr.bf16.mxu0 0
    %770 = vmatpush1.bf16.msra.mxu0 0
    %771 = vmatprep.subr.bf16.mxu0 0
    %772 = vmatpush1.bf16.msra.mxu0 0
    %773 = vmatprep.subr.bf16.mxu0 0
    %774 = vmatpush1.bf16.msra.mxu0 0
    %775 = vmatprep.subr.bf16.mxu0 0
    %776 = vmatpush1.bf16.msra.mxu0 0
    %777 = vmatprep.subr.bf16.mxu0 0
    %778 = vmatpush1.bf16.msra.mxu0 0
    %779 = vmatprep.mubr.bf16.mxu0 0
    %780 = vmatmul.mubr.bf16.gmra.mrb[0].mxu0 %v745
    %v781 = vpop.f32.mrb[0].mxu0
    %v782 = vadd.f32 %v183, %v781
    %v783 = vpop.f32.mrb[0].mxu0
    %v784 = vpop.f32.mrb[0].mxu0
    %v785 = vpop.f32.mrb[0].mxu0
    %786 = vdwg.mxu0
    %v787 = vtanh.pop %v782
    %v788 = vmul.f32 %v787, 0.5
    %v789 = vadd.f32 %v788, 0.5
    %v790 = vmul.f32 %v789, %v645
    %792 = vrot.lane.b32.xlu0 %v787, 80
    %v793 = vpop.permute.xlu0 %792
    %v795 = vmul.f32 %v789, %v793
    %797 = vrot.lane.b32.xlu0 %v795, 16
    %v798 = vpop.permute.xlu0 %797
    %v800 = vadd.f32 %v790, %v798
    %v801 = vtanh.pop %v800
    %803 = vrot.lane.b32.xlu0 %v801, 16
    %v804 = vpop.permute.xlu0 %803
    %v806 = vmul.f32 %v789, %v804
    %s807 = sld [smem:[#allocation10 + $0x3]]
    %v808 = vstv %s807
    %v809 = vmul.f32 %v808, %v806
    %v810 = vadd.f32 %v655, %v809
    %v811 = vpack.c.bf16 %v730, %v730
    %v813 = vrot.slane %v811, 3
    %814 = vrot.lane.b32.xlu0 %v813, 96
    %v815 = vpop.permute.xlu0 %814
    %v817 = vsel %vm132, %v815, 0
    %819 = vmatprep.subr.bf16.mxu0 0
    %820 = vmatpush1.bf16.msra.mxu0 %v191
    %821 = vmatprep.subr.bf16.mxu0 0
    %822 = vmatpush1.bf16.msra.mxu0 0
    %823 = vmatprep.subr.bf16.mxu0 0
    %824 = vmatpush1.bf16.msra.mxu0 0
    %825 = vmatprep.subr.bf16.mxu0 0
    %826 = vmatpush1.bf16.msra.mxu0 0
    %827 = vmatprep.subr.bf16.mxu0 0
    %828 = vmatpush1.bf16.msra.mxu0 0
    %829 = vmatprep.subr.bf16.mxu0 0
    %830 = vmatpush1.bf16.msra.mxu0 0
    %831 = vmatprep.subr.bf16.mxu0 0
    %832 = vmatpush1.bf16.msra.mxu0 0
    %833 = vmatprep.subr.bf16.mxu0 0
    %834 = vmatpush1.bf16.msra.mxu0 0
    %835 = vmatprep.subr.bf16.mxu0 0
    %836 = vmatpush1.bf16.msra.mxu0 0
    %837 = vmatprep.subr.bf16.mxu0 0
    %838 = vmatpush1.bf16.msra.mxu0 0
    %839 = vmatprep.subr.bf16.mxu0 0
    %840 = vmatpush1.bf16.msra.mxu0 0
    %841 = vmatprep.subr.bf16.mxu0 0
    %842 = vmatpush1.bf16.msra.mxu0 0
    %843 = vmatprep.subr.bf16.mxu0 0
    %844 = vmatpush1.bf16.msra.mxu0 0
    %845 = vmatprep.subr.bf16.mxu0 0
    %846 = vmatpush1.bf16.msra.mxu0 0
    %847 = vmatprep.subr.bf16.mxu0 0
    %848 = vmatpush1.bf16.msra.mxu0 0
    %849 = vmatprep.subr.bf16.mxu0 0
    %850 = vmatpush1.bf16.msra.mxu0 0
    %851 = vmatprep.mubr.bf16.mxu0 0
    %852 = vmatmul.mubr.bf16.gmra.mrb[0].mxu0 %v817
    %v853 = vpop.f32.mrb[0].mxu0
    %v854 = vadd.f32 0.0, %v853
    %v855 = vpop.f32.mrb[0].mxu0
    %v856 = vpop.f32.mrb[0].mxu0
    %v857 = vpop.f32.mrb[0].mxu0
    %858 = vdwg.mxu0
    %v859 = vadd.f32 %v174, %v854
    %v860 = vtanh.pop %v859
    %v861 = vmul.f32 %v860, 0.5
    %v862 = vadd.f32 %v861, 0.5
    %v864 = vrot.slane %v724, 6
    %v866 = vmul.f32 %v862, %v864
    %868 = vrot.lane.b32.xlu0 %v860, 80
    %v869 = vpop.permute.xlu0 %868
    %v871 = vmul.f32 %v862, %v869
    %873 = vrot.lane.b32.xlu0 %v871, 16
    %v874 = vpop.permute.xlu0 %873
    %v876 = vadd.f32 %v866, %v874
    %v877 = vtanh.pop %v876
    %879 = vrot.lane.b32.xlu0 %v877, 16
    %v880 = vpop.permute.xlu0 %879
    %v882 = vmul.f32 %v862, %v880
    %884 = vrot.lane.b32.xlu0 %v882, 96
    %v885 = vpop.permute.xlu0 %884
    %888 = vrot.lane.b32.xlu0 %v806, 112
    %v889 = vpop.permute.xlu0 %888
    %v891 = vsel %vm132, %v885, %v889
    %v892 = vpack.c.bf16 %v891, %v891
    %v894 = vsel %vm279, %v892, 0
    %896 = vmatprep.subr.bf16.mxu0 0
    %897 = vmatpush1.bf16.msra.mxu0 %v275
    %898 = vmatprep.subr.bf16.mxu0 0
    %899 = vmatpush1.bf16.msra.mxu0 %v276
    %900 = vmatprep.subr.bf16.mxu0 0
    %901 = vmatpush1.bf16.msra.mxu0 0
    %902 = vmatprep.subr.bf16.mxu0 0
    %903 = vmatpush1.bf16.msra.mxu0 0
    %904 = vmatprep.subr.bf16.mxu0 0
    %905 = vmatpush1.bf16.msra.mxu0 0
    %906 = vmatprep.subr.bf16.mxu0 0
    %907 = vmatpush1.bf16.msra.mxu0 0
    %908 = vmatprep.subr.bf16.mxu0 0
    %909 = vmatpush1.bf16.msra.mxu0 0
    %910 = vmatprep.subr.bf16.mxu0 0
    %911 = vmatpush1.bf16.msra.mxu0 0
    %912 = vmatprep.subr.bf16.mxu0 0
    %913 = vmatpush1.bf16.msra.mxu0 0
    %914 = vmatprep.subr.bf16.mxu0 0
    %915 = vmatpush1.bf16.msra.mxu0 0
    %916 = vmatprep.subr.bf16.mxu0 0
    %917 = vmatpush1.bf16.msra.mxu0 0
    %918 = vmatprep.subr.bf16.mxu0 0
    %919 = vmatpush1.bf16.msra.mxu0 0
    %920 = vmatprep.subr.bf16.mxu0 0
    %921 = vmatpush1.bf16.msra.mxu0 0
    %922 = vmatprep.subr.bf16.mxu0 0
    %923 = vmatpush1.bf16.msra.mxu0 0
    %924 = vmatprep.subr.bf16.mxu0 0
    %925 = vmatpush1.bf16.msra.mxu0 0
    %926 = vmatprep.subr.bf16.mxu0 0
    %927 = vmatpush1.bf16.msra.mxu0 0
    %928 = vmatprep.mubr.bf16.mxu0 0
    %929 = vmatmul.mubr.bf16.gmra.mrb[0].mxu0 %v894
    %v930 = vpop.f32.mrb[0].mxu0
    %v931 = vadd.f32 %v183, %v930
    %v932 = vpop.f32.mrb[0].mxu0
    %v933 = vpop.f32.mrb[0].mxu0
    %v934 = vpop.f32.mrb[0].mxu0
    %935 = vdwg.mxu0
    %v936 = vtanh.pop %v931
    %v937 = vmul.f32 %v936, 0.5
    %v938 = vadd.f32 %v937, 0.5
    %v939 = vmul.f32 %v938, %v800
    %941 = vrot.lane.b32.xlu0 %v936, 80
    %v942 = vpop.permute.xlu0 %941
    %v944 = vmul.f32 %v938, %v942
    %946 = vrot.lane.b32.xlu0 %v944, 16
    %v947 = vpop.permute.xlu0 %946
    %v949 = vadd.f32 %v939, %v947
    %v950 = vtanh.pop %v949
    %952 = vrot.lane.b32.xlu0 %v950, 16
    %v953 = vpop.permute.xlu0 %952
    %v955 = vmul.f32 %v938, %v953
    %s956 = sld [smem:[#allocation10 + $0x4]]
    %v957 = vstv %s956
    %v958 = vmul.f32 %v957, %v955
    %v959 = vadd.f32 %v810, %v958
    %v960 = vpack.c.bf16 %v882, %v882
    %962 = vrot.lane.b32.xlu0 %v960, 96
    %v963 = vpop.permute.xlu0 %962
    %v965 = vsel %vm132, %v963, 0
    %967 = vmatprep.subr.bf16.mxu0 0
    %968 = vmatpush1.bf16.msra.mxu0 %v191
    %969 = vmatprep.subr.bf16.mxu0 0
    %970 = vmatpush1.bf16.msra.mxu0 0
    %971 = vmatprep.subr.bf16.mxu0 0
    %972 = vmatpush1.bf16.msra.mxu0 0
    %973 = vmatprep.subr.bf16.mxu0 0
    %974 = vmatpush1.bf16.msra.mxu0 0
    %975 = vmatprep.subr.bf16.mxu0 0
    %976 = vmatpush1.bf16.msra.mxu0 0
    %977 = vmatprep.subr.bf16.mxu0 0
    %978 = vmatpush1.bf16.msra.mxu0 0
    %979 = vmatprep.subr.bf16.mxu0 0
    %980 = vmatpush1.bf16.msra.mxu0 0
    %981 = vmatprep.subr.bf16.mxu0 0
    %982 = vmatpush1.bf16.msra.mxu0 0
    %983 = vmatprep.subr.bf16.mxu0 0
    %984 = vmatpush1.bf16.msra.mxu0 0
    %985 = vmatprep.subr.bf16.mxu0 0
    %986 = vmatpush1.bf16.msra.mxu0 0
    %987 = vmatprep.subr.bf16.mxu0 0
    %988 = vmatpush1.bf16.msra.mxu0 0
    %989 = vmatprep.subr.bf16.mxu0 0
    %990 = vmatpush1.bf16.msra.mxu0 0
    %991 = vmatprep.subr.bf16.mxu0 0
    %992 = vmatpush1.bf16.msra.mxu0 0
    %993 = vmatprep.subr.bf16.mxu0 0
    %994 = vmatpush1.bf16.msra.mxu0 0
    %995 = vmatprep.subr.bf16.mxu0 0
    %996 = vmatpush1.bf16.msra.mxu0 0
    %997 = vmatprep.subr.bf16.mxu0 0
    %998 = vmatpush1.bf16.msra.mxu0 0
    %999 = vmatprep.mubr.bf16.mxu0 0
    %1000 = vmatmul.mubr.bf16.gmra.mrb[0].mxu0 %v965
    %v1001 = vpop.f32.mrb[0].mxu0
    %v1002 = vadd.f32 0.0, %v1001
    %v1003 = vpop.f32.mrb[0].mxu0
    %v1004 = vpop.f32.mrb[0].mxu0
    %v1005 = vpop.f32.mrb[0].mxu0
    %1006 = vdwg.mxu0
    %v1008 = vrot.slane %v1002, 6
    %v1010 = vadd.f32 %v174, %v1008
    %v1011 = vtanh.pop %v1010
    %v1012 = vmul.f32 %v1011, 0.5
    %v1013 = vadd.f32 %v1012, 0.5
    %v1015 = vrot.slane %v876, 6
    %v1017 = vmul.f32 %v1013, %v1015
    %1019 = vrot.lane.b32.xlu0 %v1011, 80
    %v1020 = vpop.permute.xlu0 %1019
    %v1022 = vmul.f32 %v1013, %v1020
    %1024 = vrot.lane.b32.xlu0 %v1022, 16
    %v1025 = vpop.permute.xlu0 %1024
    %v1027 = vadd.f32 %v1017, %v1025
    %v1028 = vtanh.pop %v1027
    %1030 = vrot.lane.b32.xlu0 %v1028, 16
    %v1031 = vpop.permute.xlu0 %1030
    %v1033 = vmul.f32 %v1013, %v1031
    %1035 = vrot.lane.b32.xlu0 %v1033, 96
    %v1036 = vpop.permute.xlu0 %1035
    %v1039 = vrot.slane %v955, 6
    %1040 = vrot.lane.b32.xlu0 %v1039, 112
    %v1041 = vpop.permute.xlu0 %1040
    %v1043 = vsel %vm132, %v1036, %v1041
    %v1044 = vpack.c.bf16 %v1043, %v1043
    %v1046 = vrot.slane %v1044, 1
    %v1048 = vsel %vm279, %v1046, 0
    %1050 = vmatprep.subr.bf16.mxu0 0
    %1051 = vmatpush1.bf16.msra.mxu0 %v275
    %1052 = vmatprep.subr.bf16.mxu0 0
    %1053 = vmatpush1.bf16.msra.mxu0 %v276
    %1054 = vmatprep.subr.bf16.mxu0 0
    %1055 = vmatpush1.bf16.msra.mxu0 0
    %1056 = vmatprep.subr.bf16.mxu0 0
    %1057 = vmatpush1.bf16.msra.mxu0 0
    %1058 = vmatprep.subr.bf16.mxu0 0
    %1059 = vmatpush1.bf16.msra.mxu0 0
    %1060 = vmatprep.subr.bf16.mxu0 0
    %1061 = vmatpush1.bf16.msra.mxu0 0
    %1062 = vmatprep.subr.bf16.mxu0 0
    %1063 = vmatpush1.bf16.msra.mxu0 0
    %1064 = vmatprep.subr.bf16.mxu0 0
    %1065 = vmatpush1.bf16.msra.mxu0 0
    %1066 = vmatprep.subr.bf16.mxu0 0
    %1067 = vmatpush1.bf16.msra.mxu0 0
    %1068 = vmatprep.subr.bf16.mxu0 0
    %1069 = vmatpush1.bf16.msra.mxu0 0
    %1070 = vmatprep.subr.bf16.mxu0 0
    %1071 = vmatpush1.bf16.msra.mxu0 0
    %1072 = vmatprep.subr.bf16.mxu0 0
    %1073 = vmatpush1.bf16.msra.mxu0 0
    %1074 = vmatprep.subr.bf16.mxu0 0
    %1075 = vmatpush1.bf16.msra.mxu0 0
    %1076 = vmatprep.subr.bf16.mxu0 0
    %1077 = vmatpush1.bf16.msra.mxu0 0
    %1078 = vmatprep.subr.bf16.mxu0 0
    %1079 = vmatpush1.bf16.msra.mxu0 0
    %1080 = vmatprep.subr.bf16.mxu0 0
    %1081 = vmatpush1.bf16.msra.mxu0 0
    %1082 = vmatprep.mubr.bf16.mxu0 0
    %1083 = vmatmul.mubr.bf16.gmra.mrb[0].mxu0 %v1048
    %v1084 = vpop.f32.mrb[0].mxu0
    %v1085 = vadd.f32 %v183, %v1084
    %v1086 = vpop.f32.mrb[0].mxu0
    %v1087 = vpop.f32.mrb[0].mxu0
    %v1088 = vpop.f32.mrb[0].mxu0
    %1089 = vdwg.mxu0
    %v1090 = vtanh.pop %v1085
    %v1091 = vmul.f32 %v1090, 0.5
    %v1092 = vadd.f32 %v1091, 0.5
    %v1093 = vmul.f32 %v1092, %v949
    %1095 = vrot.lane.b32.xlu0 %v1090, 80
    %v1096 = vpop.permute.xlu0 %1095
    %v1098 = vmul.f32 %v1092, %v1096
    %1100 = vrot.lane.b32.xlu0 %v1098, 16
    %v1101 = vpop.permute.xlu0 %1100
    %v1103 = vadd.f32 %v1093, %v1101
    %v1104 = vtanh.pop %v1103
    %1106 = vrot.lane.b32.xlu0 %v1104, 16
    %v1107 = vpop.permute.xlu0 %1106
    %v1109 = vmul.f32 %v1092, %v1107
    %s1110 = sld [smem:[#allocation10 + $0x5]]
    %v1111 = vstv %s1110
    %v1112 = vmul.f32 %v1111, %v1109
    %v1113 = vadd.f32 %v959, %v1112
    %v1114 = vpack.c.bf16 %v1033, %v1033
    %v1116 = vrot.slane %v1114, 1
    %1117 = vrot.lane.b32.xlu0 %v1116, 96
    %v1118 = vpop.permute.xlu0 %1117
    %v1120 = vsel %vm132, %v1118, 0
    %1122 = vmatprep.subr.bf16.mxu0 0
    %1123 = vmatpush1.bf16.msra.mxu0 %v191
    %1124 = vmatprep.subr.bf16.mxu0 0
    %1125 = vmatpush1.bf16.msra.mxu0 0
    %1126 = vmatprep.subr.bf16.mxu0 0
    %1127 = vmatpush1.bf16.msra.mxu0 0
    %1128 = vmatprep.subr.bf16.mxu0 0
    %1129 = vmatpush1.bf16.msra.mxu0 0
    %1130 = vmatprep.subr.bf16.mxu0 0
    %1131 = vmatpush1.bf16.msra.mxu0 0
    %1132 = vmatprep.subr.bf16.mxu0 0
    %1133 = vmatpush1.bf16.msra.mxu0 0
    %1134 = vmatprep.subr.bf16.mxu0 0
    %1135 = vmatpush1.bf16.msra.mxu0 0
    %1136 = vmatprep.subr.bf16.mxu0 0
    %1137 = vmatpush1.bf16.msra.mxu0 0
    %1138 = vmatprep.subr.bf16.mxu0 0
    %1139 = vmatpush1.bf16.msra.mxu0 0
    %1140 = vmatprep.subr.bf16.mxu0 0
    %1141 = vmatpush1.bf16.msra.mxu0 0
    %1142 = vmatprep.subr.bf16.mxu0 0
    %1143 = vmatpush1.bf16.msra.mxu0 0
    %1144 = vmatprep.subr.bf16.mxu0 0
    %1145 = vmatpush1.bf16.msra.mxu0 0
    %1146 = vmatprep.subr.bf16.mxu0 0
    %1147 = vmatpush1.bf16.msra.mxu0 0
    %1148 = vmatprep.subr.bf16.mxu0 0
    %1149 = vmatpush1.bf16.msra.mxu0 0
    %1150 = vmatprep.subr.bf16.mxu0 0
    %1151 = vmatpush1.bf16.msra.mxu0 0
    %1152 = vmatprep.subr.bf16.mxu0 0
    %1153 = vmatpush1.bf16.msra.mxu0 0
    %1154 = vmatprep.mubr.bf16.mxu0 0
    %1155 = vmatmul.mubr.bf16.gmra.mrb[0].mxu0 %v1120
    %v1156 = vpop.f32.mrb[0].mxu0
    %v1157 = vadd.f32 0.0, %v1156
    %v1158 = vpop.f32.mrb[0].mxu0
    %v1159 = vpop.f32.mrb[0].mxu0
    %v1160 = vpop.f32.mrb[0].mxu0
    %1161 = vdwg.mxu0
    %v1163 = vrot.slane %v1157, 4
    %v1165 = vadd.f32 %v174, %v1163
    %v1166 = vtanh.pop %v1165
    %v1167 = vmul.f32 %v1166, 0.5
    %v1168 = vadd.f32 %v1167, 0.5
    %v1170 = vrot.slane %v1027, 6
    %v1172 = vmul.f32 %v1168, %v1170
    %1174 = vrot.lane.b32.xlu0 %v1166, 80
    %v1175 = vpop.permute.xlu0 %1174
    %v1177 = vmul.f32 %v1168, %v1175
    %1179 = vrot.lane.b32.xlu0 %v1177, 16
    %v1180 = vpop.permute.xlu0 %1179
    %v1182 = vadd.f32 %v1172, %v1180
    %v1183 = vtanh.pop %v1182
    %1185 = vrot.lane.b32.xlu0 %v1183, 16
    %v1186 = vpop.permute.xlu0 %1185
    %v1188 = vmul.f32 %v1168, %v1186
    %1190 = vrot.lane.b32.xlu0 %v1188, 96
    %v1191 = vpop.permute.xlu0 %1190
    %v1194 = vrot.slane %v1109, 4
    %1195 = vrot.lane.b32.xlu0 %v1194, 112
    %v1196 = vpop.permute.xlu0 %1195
    %v1198 = vsel %vm132, %v1191, %v1196
    %v1199 = vpack.c.bf16 %v1198, %v1198
    %v1201 = vrot.slane %v1199, 2
    %v1203 = vsel %vm279, %v1201, 0
    %1205 = vmatprep.subr.bf16.mxu0 0
    %1206 = vmatpush1.bf16.msra.mxu0 %v275
    %1207 = vmatprep.subr.bf16.mxu0 0
    %1208 = vmatpush1.bf16.msra.mxu0 %v276
    %1209 = vmatprep.subr.bf16.mxu0 0
    %1210 = vmatpush1.bf16.msra.mxu0 0
    %1211 = vmatprep.subr.bf16.mxu0 0
    %1212 = vmatpush1.bf16.msra.mxu0 0
    %1213 = vmatprep.subr.bf16.mxu0 0
    %1214 = vmatpush1.bf16.msra.mxu0 0
    %1215 = vmatprep.subr.bf16.mxu0 0
    %1216 = vmatpush1.bf16.msra.mxu0 0
    %1217 = vmatprep.subr.bf16.mxu0 0
    %1218 = vmatpush1.bf16.msra.mxu0 0
    %1219 = vmatprep.subr.bf16.mxu0 0
    %1220 = vmatpush1.bf16.msra.mxu0 0
    %1221 = vmatprep.subr.bf16.mxu0 0
    %1222 = vmatpush1.bf16.msra.mxu0 0
    %1223 = vmatprep.subr.bf16.mxu0 0
    %1224 = vmatpush1.bf16.msra.mxu0 0
    %1225 = vmatprep.subr.bf16.mxu0 0
    %1226 = vmatpush1.bf16.msra.mxu0 0
    %1227 = vmatprep.subr.bf16.mxu0 0
    %1228 = vmatpush1.bf16.msra.mxu0 0
    %1229 = vmatprep.subr.bf16.mxu0 0
    %1230 = vmatpush1.bf16.msra.mxu0 0
    %1231 = vmatprep.subr.bf16.mxu0 0
    %1232 = vmatpush1.bf16.msra.mxu0 0
    %1233 = vmatprep.subr.bf16.mxu0 0
    %1234 = vmatpush1.bf16.msra.mxu0 0
    %1235 = vmatprep.subr.bf16.mxu0 0
    %1236 = vmatpush1.bf16.msra.mxu0 0
    %1237 = vmatprep.mubr.bf16.mxu0 0
    %1238 = vmatmul.mubr.bf16.gmra.mrb[0].mxu0 %v1203
    %v1239 = vpop.f32.mrb[0].mxu0
    %v1240 = vadd.f32 %v183, %v1239
    %v1241 = vpop.f32.mrb[0].mxu0
    %v1242 = vpop.f32.mrb[0].mxu0
    %v1243 = vpop.f32.mrb[0].mxu0
    %1244 = vdwg.mxu0
    %v1245 = vtanh.pop %v1240
    %v1246 = vmul.f32 %v1245, 0.5
    %v1247 = vadd.f32 %v1246, 0.5
    %v1248 = vmul.f32 %v1247, %v1103
    %1250 = vrot.lane.b32.xlu0 %v1245, 80
    %v1251 = vpop.permute.xlu0 %1250
    %v1253 = vmul.f32 %v1247, %v1251
    %1255 = vrot.lane.b32.xlu0 %v1253, 16
    %v1256 = vpop.permute.xlu0 %1255
    %v1258 = vadd.f32 %v1248, %v1256
    %v1259 = vtanh.pop %v1258
    %1261 = vrot.lane.b32.xlu0 %v1259, 16
    %v1262 = vpop.permute.xlu0 %1261
    %v1264 = vmul.f32 %v1247, %v1262
    %s1265 = sld [smem:[#allocation10 + $0x6]]
    %v1266 = vstv %s1265
    %v1267 = vmul.f32 %v1266, %v1264
    %v1268 = vadd.f32 %v1113, %v1267
    %v1269 = vpack.c.bf16 %v1188, %v1188
    %v1271 = vrot.slane %v1269, 2
    %1272 = vrot.lane.b32.xlu0 %v1271, 96
    %v1273 = vpop.permute.xlu0 %1272
    %v1275 = vsel %vm132, %v1273, 0
    %1277 = vmatprep.subr.bf16.mxu0 0
    %1278 = vmatpush1.bf16.msra.mxu0 %v191
    %1279 = vmatprep.subr.bf16.mxu0 0
    %1280 = vmatpush1.bf16.msra.mxu0 0
    %1281 = vmatprep.subr.bf16.mxu0 0
    %1282 = vmatpush1.bf16.msra.mxu0 0
    %1283 = vmatprep.subr.bf16.mxu0 0
    %1284 = vmatpush1.bf16.msra.mxu0 0
    %1285 = vmatprep.subr.bf16.mxu0 0
    %1286 = vmatpush1.bf16.msra.mxu0 0
    %1287 = vmatprep.subr.bf16.mxu0 0
    %1288 = vmatpush1.bf16.msra.mxu0 0
    %1289 = vmatprep.subr.bf16.mxu0 0
    %1290 = vmatpush1.bf16.msra.mxu0 0
    %1291 = vmatprep.subr.bf16.mxu0 0
    %1292 = vmatpush1.bf16.msra.mxu0 0
    %1293 = vmatprep.subr.bf16.mxu0 0
    %1294 = vmatpush1.bf16.msra.mxu0 0
    %1295 = vmatprep.subr.bf16.mxu0 0
    %1296 = vmatpush1.bf16.msra.mxu0 0
    %1297 = vmatprep.subr.bf16.mxu0 0
    %1298 = vmatpush1.bf16.msra.mxu0 0
    %1299 = vmatprep.subr.bf16.mxu0 0
    %1300 = vmatpush1.bf16.msra.mxu0 0
    %1301 = vmatprep.subr.bf16.mxu0 0
    %1302 = vmatpush1.bf16.msra.mxu0 0
    %1303 = vmatprep.subr.bf16.mxu0 0
    %1304 = vmatpush1.bf16.msra.mxu0 0
    %1305 = vmatprep.subr.bf16.mxu0 0
    %1306 = vmatpush1.bf16.msra.mxu0 0
    %1307 = vmatprep.subr.bf16.mxu0 0
    %1308 = vmatpush1.bf16.msra.mxu0 0
    %1309 = vmatprep.mubr.bf16.mxu0 0
    %1310 = vmatmul.mubr.bf16.gmra.mrb[0].mxu0 %v1275
    %v1311 = vpop.f32.mrb[0].mxu0
    %v1312 = vadd.f32 0.0, %v1311
    %v1313 = vpop.f32.mrb[0].mxu0
    %v1314 = vpop.f32.mrb[0].mxu0
    %v1315 = vpop.f32.mrb[0].mxu0
    %1316 = vdwg.mxu0
    %v1318 = vrot.slane %v1312, 2
    %v1320 = vadd.f32 %v174, %v1318
    %v1321 = vtanh.pop %v1320
    %v1322 = vmul.f32 %v1321, 0.5
    %v1323 = vadd.f32 %v1322, 0.5
    %v1325 = vrot.slane %v1182, 6
    %v1327 = vmul.f32 %v1323, %v1325
    %1329 = vrot.lane.b32.xlu0 %v1321, 80
    %v1330 = vpop.permute.xlu0 %1329
    %v1332 = vmul.f32 %v1323, %v1330
    %1334 = vrot.lane.b32.xlu0 %v1332, 16
    %v1335 = vpop.permute.xlu0 %1334
    %v1337 = vadd.f32 %v1327, %v1335
    %v1338 = vtanh.pop %v1337
    %1340 = vrot.lane.b32.xlu0 %v1338, 16
    %v1341 = vpop.permute.xlu0 %1340
    %v1343 = vmul.f32 %v1323, %v1341
    %1345 = vrot.lane.b32.xlu0 %v1343, 96
    %v1346 = vpop.permute.xlu0 %1345
    %v1349 = vrot.slane %v1264, 2
    %1350 = vrot.lane.b32.xlu0 %v1349, 112
    %v1351 = vpop.permute.xlu0 %1350
    %v1353 = vsel %vm132, %v1346, %v1351
    %v1354 = vpack.c.bf16 %v1353, %v1353
    %v1356 = vrot.slane %v1354, 3
    %v1358 = vsel %vm279, %v1356, 0
    %1360 = vmatprep.subr.bf16.mxu0 0
    %1361 = vmatpush1.bf16.msra.mxu0 %v275
    %1362 = vmatprep.subr.bf16.mxu0 0
    %1363 = vmatpush1.bf16.msra.mxu0 %v276
    %1364 = vmatprep.subr.bf16.mxu0 0
    %1365 = vmatpush1.bf16.msra.mxu0 0
    %1366 = vmatprep.subr.bf16.mxu0 0
    %1367 = vmatpush1.bf16.msra.mxu0 0
    %1368 = vmatprep.subr.bf16.mxu0 0
    %1369 = vmatpush1.bf16.msra.mxu0 0
    %1370 = vmatprep.subr.bf16.mxu0 0
    %1371 = vmatpush1.bf16.msra.mxu0 0
    %1372 = vmatprep.subr.bf16.mxu0 0
    %1373 = vmatpush1.bf16.msra.mxu0 0
    %1374 = vmatprep.subr.bf16.mxu0 0
    %1375 = vmatpush1.bf16.msra.mxu0 0
    %1376 = vmatprep.subr.bf16.mxu0 0
    %1377 = vmatpush1.bf16.msra.mxu0 0
    %1378 = vmatprep.subr.bf16.mxu0 0
    %1379 = vmatpush1.bf16.msra.mxu0 0
    %1380 = vmatprep.subr.bf16.mxu0 0
    %1381 = vmatpush1.bf16.msra.mxu0 0
    %1382 = vmatprep.subr.bf16.mxu0 0
    %1383 = vmatpush1.bf16.msra.mxu0 0
    %1384 = vmatprep.subr.bf16.mxu0 0
    %1385 = vmatpush1.bf16.msra.mxu0 0
    %1386 = vmatprep.subr.bf16.mxu0 0
    %1387 = vmatpush1.bf16.msra.mxu0 0
    %1388 = vmatprep.subr.bf16.mxu0 0
    %1389 = vmatpush1.bf16.msra.mxu0 0
    %1390 = vmatprep.subr.bf16.mxu0 0
    %1391 = vmatpush1.bf16.msra.mxu0 0
    %1392 = vmatprep.mubr.bf16.mxu0 0
    %1393 = vmatmul.mubr.bf16.gmra.mrb[0].mxu0 %v1358
    %v1394 = vpop.f32.mrb[0].mxu0
    %v1395 = vadd.f32 %v183, %v1394
    %v1396 = vpop.f32.mrb[0].mxu0
    %v1397 = vpop.f32.mrb[0].mxu0
    %v1398 = vpop.f32.mrb[0].mxu0
    %1399 = vdwg.mxu0
    %v1400 = vtanh.pop %v1395
    %v1401 = vmul.f32 %v1400, 0.5
    %v1402 = vadd.f32 %v1401, 0.5
    %v1403 = vmul.f32 %v1402, %v1258
    %1405 = vrot.lane.b32.xlu0 %v1400, 80
    %v1406 = vpop.permute.xlu0 %1405
    %v1408 = vmul.f32 %v1402, %v1406
    %1410 = vrot.lane.b32.xlu0 %v1408, 16
    %v1411 = vpop.permute.xlu0 %1410
    %v1413 = vadd.f32 %v1403, %v1411
    %v1414 = vtanh.pop %v1413
    %1416 = vrot.lane.b32.xlu0 %v1414, 16
    %v1417 = vpop.permute.xlu0 %1416
    %v1419 = vmul.f32 %v1402, %v1417
    %s1420 = sld [smem:[#allocation10 + $0x7]]
    %v1421 = vstv %s1420
    %v1422 = vmul.f32 %v1421, %v1419
    %v1423 = vadd.f32 %v1268, %v1422
    %s1424 = sld [smem:[#allocation3]]
    %v1425 = vstv %s1424
    %v1426 = vadd.f32 %v1423, %v1425
    %v1427 = vpack.c.bf16 %v1426, %v1426
    %v1428 = vld [vmem:[%s9] sm:$0xf]
    %v1429 = vld [vmem:[%s9 + $0x4] sm:$0xf]
    %v1430 = vld [vmem:[%s10] sm:$0x1]
    %v1432 = vlaneseq
    %v1433 = vshrl.u32 %v1432, 7
    %v1434 = vsub.s32 0, %v1433
    %v1435 = vrot.slane %v1430, %v1434
    %1438 = vrot.lane.b32.xlu0 %v1427, 96
    %v1439 = vpop.permute.xlu0 %1438
    %v1442 = vunpack.c.l.b16 %v1428
    %v1443 = vunpack.c.l.b16 %v1429
    %v1444 = vpack.c.b16 %v1443, %v1442
    %v1447 = vsel %vm132, %v1439, 0
    %1449 = vmatprep.subr.bf16.mxu0 0
    %1450 = vmatpush1.bf16.msra.mxu0 %v1444
    %1451 = vmatprep.subr.bf16.mxu0 0
    %1452 = vmatpush1.bf16.msra.mxu0 0
    %1453 = vmatprep.subr.bf16.mxu0 0
    %1454 = vmatpush1.bf16.msra.mxu0 0
    %1455 = vmatprep.subr.bf16.mxu0 0
    %1456 = vmatpush1.bf16.msra.mxu0 0
    %1457 = vmatprep.subr.bf16.mxu0 0
    %1458 = vmatpush1.bf16.msra.mxu0 0
    %1459 = vmatprep.subr.bf16.mxu0 0
    %1460 = vmatpush1.bf16.msra.mxu0 0
    %1461 = vmatprep.subr.bf16.mxu0 0
    %1462 = vmatpush1.bf16.msra.mxu0 0
    %1463 = vmatprep.subr.bf16.mxu0 0
    %1464 = vmatpush1.bf16.msra.mxu0 0
    %1465 = vmatprep.subr.bf16.mxu0 0
    %1466 = vmatpush1.bf16.msra.mxu0 0
    %1467 = vmatprep.subr.bf16.mxu0 0
    %1468 = vmatpush1.bf16.msra.mxu0 0
    %1469 = vmatprep.subr.bf16.mxu0 0
    %1470 = vmatpush1.bf16.msra.mxu0 0
    %1471 = vmatprep.subr.bf16.mxu0 0
    %1472 = vmatpush1.bf16.msra.mxu0 0
    %1473 = vmatprep.subr.bf16.mxu0 0
    %1474 = vmatpush1.bf16.msra.mxu0 0
    %1475 = vmatprep.subr.bf16.mxu0 0
    %1476 = vmatpush1.bf16.msra.mxu0 0
    %1477 = vmatprep.subr.bf16.mxu0 0
    %1478 = vmatpush1.bf16.msra.mxu0 0
    %1479 = vmatprep.subr.bf16.mxu0 0
    %1480 = vmatpush1.bf16.msra.mxu0 0
    %1481 = vmatprep.mubr.bf16.mxu0 0
    %1482 = vmatmul.mubr.bf16.gmra.mrb[0].mxu0 %v1447
    %v1483 = vpop.f32.mrb[0].mxu0
    %v1484 = vadd.f32 %v1435, %v1483
    %v1485 = vpop.f32.mrb[0].mxu0
    %v1486 = vpop.f32.mrb[0].mxu0
    %v1487 = vpop.f32.mrb[0].mxu0
    %1488 = vdwg.mxu0
    %vm1489 = vcmask 25600
    %1490 = vst.msk [vmem:[#allocation11] sm:$0x3] %vm1489, %v1484
    // Predicated region
    $region58: #{tpu_custom_call.1} parent=1 // pred_check
      _
    $region59: #{tpu_custom_call.1} parent=1 // pred_check_branch
      %1492 = sbr.rel (0) target = $region61
    $region60: #{tpu_custom_call.1} parent=1 // pred_region
      %s1494 = ssub.s32 32, 32
      %1495 = vsyncadd [#allocation6], %s1494
      %s1497 = sshll.u32 [#allocation11], 4
      %s1498 = int_to_ptr.vmem [resolvable:$true] %s1497
      %1500 = dma.vmem_to_hbm [thread:$0]  %s1498, 32, %s11, [#allocation6]
    $region61: #{tpu_custom_call.1} parent=1 // pred_fallthru
      _
    // Predicated region
    $region62: #{tpu_custom_call.1} parent=1 // pred_check
      _
    $region63: #{tpu_custom_call.1} parent=1 // pred_check_branch
      %1502 = sbr.rel (0) target = $region65
    $region64: #{tpu_custom_call.1} parent=1 // pred_region
      %1503 = dma.done [#allocation6], 32
    $region65: #{tpu_custom_call.1} parent=1 // pred_fallthru
      _
    %1504 = vsyncpa [#allocation5], 1
    %1505 = vsyncpa [#allocation6], 1
    %1506 = vsyncpa [#allocation7], 1
    %1507 = vsyncpa [#allocation8], 1

</llo_original>
